<compile_context>
chip_gen: v5e
topology: v5e:2x2
jax: 0.10.0
libtpu: 0.0.40
codegen_flags: <defaults>
</compile_context>

<pallas_src>
import jax
import jax.numpy as jnp
from jax.experimental import pallas as pl
from jax.experimental.pallas import tpu as pltpu

# ---------------- config (small, PhiConfig-like) ----------------
VOCAB = 64
HIDDEN = 32
NUM_HEADS = 4
HEAD_SIZE = HIDDEN // NUM_HEADS               # 8
PARTIAL_ROTARY_FACTOR = 0.5
ROT = int(PARTIAL_ROTARY_FACTOR * HEAD_SIZE)  # 4 (must be even)
N_INNER = 4 * HIDDEN                          # 128
NUM_LAYERS = 2
EPS = 1e-5
ROPE_THETA = 10000.0
SEQ = 8

QK = 2 * HIDDEN                               # 64 (q|k columns)
ROPE_LANES = 2 * QK                           # 128-lane rope slab = [q|k | qp|kp]
# fused input-projection column layout (groups 128-aligned where possible):
#   [0   : 128)  fc1 pre-activation
#   [128 : 192)  q | k                   (pre-rope)
#   [192 : 256)  signed rope partners of q | k  ( = (q|k) @ P )
#   [256 : 288)  v
W_IN = N_INNER + ROPE_LANES + HIDDEN          # 288


# ---------------- fused all-layers kernel (grid=(1,), layers unrolled) ----------------
def phi_kernel(h0_ref, ln_g_ref, ln_b_ref, w_in_ref, b_in_ref,
               w_fc2_ref, w_d_ref, b_out_ref, rope_ref, fg_ref, fb_ref,
               out_ref):

    def layernorm(x, g, b):
        mu = jnp.mean(x, axis=-1, keepdims=True)
        c = x - mu
        var = jnp.mean(c * c, axis=-1, keepdims=True)
        return c * jax.lax.rsqrt(var + EPS) * g + b

    def gelu_new(x):
        c = jnp.float32(0.7978845608028654)   # sqrt(2/pi)
        return 0.5 * x * (1.0 + jnp.tanh(c * (x + 0.044715 * x * x * x)))

    # hoisted constants (built once, reused by both layers)
    row = jax.lax.broadcasted_iota(jnp.int32, (SEQ, SEQ), 0)
    col = jax.lax.broadcasted_iota(jnp.int32, (SEQ, SEQ), 1)
    causal = jnp.where(row >= col, 0.0, -1e30).astype(jnp.float32)
    t_cos = rope_ref[0]                                   # [S, 128] f32
    t_sin = rope_ref[1]

    h = h0_ref[...]                                       # [S, HIDDEN] f32 carry

    for l in range(NUM_LAYERS):                           # statically unrolled
        hn = layernorm(h, ln_g_ref[l], ln_b_ref[l])

        # ---- fused [fc1 | q|k | rope-partner(q|k) | v] projection (bf16 MXU) ----
        zin = jnp.dot(hn.astype(jnp.bfloat16), w_in_ref[l],
                      preferred_element_type=jnp.float32) + b_in_ref[l]  # [S, 288] f32

        # ---- partial NeoX rope on a whole 128-lane slab (no sub-tile math) ----
        slab = zin[:, N_INNER:N_INNER + ROPE_LANES]        # [S,128] = [q|k | qp|kp]
        rolled = pltpu.roll(slab, QK, 1)                   # [qp|kp | q|k]
        rot = slab * t_cos + rolled * t_sin                # lanes [0:64) = roped q|k
        v_all = zin[:, N_INNER + ROPE_LANES:]              # [S, HIDDEN]

        # ---- per-head causal attention; dense proj folded per head (no concat) ----
        wd_l = w_d_ref[l]                                  # [HIDDEN, HIDDEN] bf16
        attn_dense = None
        for hd in range(NUM_HEADS):
            q_h = rot[:, hd * HEAD_SIZE:(hd + 1) * HEAD_SIZE]                   # [S,HS]
            k_h = rot[:, HIDDEN + hd * HEAD_SIZE:HIDDEN + (hd + 1) * HEAD_SIZE]
            v_h = v_all[:, hd * HEAD_SIZE:(hd + 1) * HEAD_SIZE]
            # scores (q already carries 1/sqrt(head_size) via the rope table)
            s = jax.lax.dot_general(
                q_h.astype(jnp.bfloat16), k_h.astype(jnp.bfloat16),
                (((1,), (1,)), ((), ())),
                preferred_element_type=jnp.float32) + causal                    # [S,S]
            s = s - jnp.max(s, axis=-1, keepdims=True)
            p = jnp.exp(s)
            p = p * pl.reciprocal(jnp.sum(p, axis=-1, keepdims=True), approx=True)
            ctx = jnp.dot(p.astype(jnp.bfloat16), v_h.astype(jnp.bfloat16),
                          preferred_element_type=jnp.float32)                   # [S,HS]
            wd_h = wd_l[hd * HEAD_SIZE:(hd + 1) * HEAD_SIZE, :]                 # [HS,H]
            contrib = jnp.dot(ctx.astype(jnp.bfloat16), wd_h,
                              preferred_element_type=jnp.float32)               # [S,H]
            attn_dense = contrib if attn_dense is None else attn_dense + contrib

        # ---- MLP (gelu_new in f32, fc2 on MXU in bf16) ----
        m = gelu_new(zin[:, :N_INNER])                                          # [S,NI]
        mlp = jnp.dot(m.astype(jnp.bfloat16), w_fc2_ref[l],
                      preferred_element_type=jnp.float32)                       # [S,H]

        # parallel residual; b_out = bfc2 + bdense folded at prep time
        h = attn_dense + mlp + b_out_ref[l] + h

    # final LayerNorm
    out_ref[...] = layernorm(h, fg_ref[...], fb_ref[...])


# ---------------- parameter prep (done once, outside the kernel) ----------------
def make_params(key):
    """Deterministic synthetic parameters (shapes per PhiModel.__init__)."""
    keys = jax.random.split(key, 16 * NUM_LAYERS + 3)
    kit = iter(keys)

    def nrm(k, shape, scale=0.02):
        return (scale * jax.random.normal(k, shape)).astype(jnp.float32)

    embed = nrm(next(kit), (VOCAB, HIDDEN), 1.0)

    layers = []
    for _ in range(NUM_LAYERS):
        layers.append({
            "ln_g": 1.0 + nrm(next(kit), (1, HIDDEN)),
            "ln_b": nrm(next(kit), (1, HIDDEN)),
            "wqkv": nrm(next(kit), (HIDDEN, 3 * HIDDEN)),
            "bqkv": nrm(next(kit), (1, 3 * HIDDEN)),
            "wd":   nrm(next(kit), (HIDDEN, HIDDEN)),
            "bd":   nrm(next(kit), (1, HIDDEN)),
            "wfc1": nrm(next(kit), (HIDDEN, N_INNER)),
            "bfc1": nrm(next(kit), (1, N_INNER)),
            "wfc2": nrm(next(kit), (N_INNER, HIDDEN)),
            "bfc2": nrm(next(kit), (1, HIDDEN)),
        })

    final_ln_g = 1.0 + nrm(next(kit), (1, HIDDEN))
    final_ln_b = nrm(next(kit), (1, HIDDEN))
    return embed, layers, final_ln_g, final_ln_b


def prepare_fused_weights(layers, fg, fb):
    """Fuse + stack per-layer weights; matmul weights in bf16, no padding."""
    # Per-head signed partner matrix: (x @ Ph)[j] = -x[j+R/2] for j<R/2,
    #                                 (x @ Ph)[j] = +x[j-R/2] for R/2<=j<R, else 0.
    Ph = jnp.zeros((HEAD_SIZE, HEAD_SIZE), jnp.float32)
    half = ROT // 2
    for j in range(half):
        Ph = Ph.at[j + half, j].set(-1.0)
        Ph = Ph.at[j, j + half].set(1.0)
    P2 = jnp.kron(jnp.eye(2 * NUM_HEADS, dtype=jnp.float32), Ph)     # [2H, 2H]

    w_in, b_in, w_fc2, w_d, b_out, ln_g, ln_b = [], [], [], [], [], [], []
    for p in layers:
        wqk = p["wqkv"][:, :QK]
        wv = p["wqkv"][:, QK:]
        bqk = p["bqkv"][:, :QK]
        bv = p["bqkv"][:, QK:]
        w_in.append(jnp.concatenate([p["wfc1"], wqk, wqk @ P2, wv], axis=1))  # [H, 288]
        b_in.append(jnp.concatenate([p["bfc1"], bqk, bqk @ P2, bv], axis=1))  # [1, 288]
        w_fc2.append(p["wfc2"])                                               # [NI, H]
        w_d.append(p["wd"])                                                   # [H, H]
        b_out.append(p["bfc2"] + p["bd"])                                     # [1, H]
        ln_g.append(p["ln_g"])
        ln_b.append(p["ln_b"])

    return {
        "w_in":  jnp.stack(w_in).astype(jnp.bfloat16),    # [L, H, 288]
        "b_in":  jnp.stack(b_in),                         # [L, 1, 288] f32
        "w_fc2": jnp.stack(w_fc2).astype(jnp.bfloat16),   # [L, NI, H]
        "w_d":   jnp.stack(w_d).astype(jnp.bfloat16),     # [L, H, H]
        "b_out": jnp.stack(b_out),                        # [L, 1, H] f32
        "ln_g":  jnp.stack(ln_g),                         # [L, 1, H] f32
        "ln_b":  jnp.stack(ln_b),                         # [L, 1, H] f32
        "fg": fg,                                         # [1, H] f32
        "fb": fb,                                         # [1, H] f32
    }


def _rope_tables(positions):
    """Lane-dense [2, S, 128] cos/sin tables matching the [q|k | qp|kp] slab.

    Lanes [0:32)=q, [32:64)=k, [64:128)=zeros (partner lanes, unused output);
    q lanes are pre-multiplied by head_size^-0.5 (attention scaling).
    """
    inv_freq = 1.0 / (ROPE_THETA ** (jnp.arange(0, ROT, 2, dtype=jnp.float32) / ROT))
    freqs = positions.astype(jnp.float32)[:, None] * inv_freq[None, :]   # [S, ROT//2]
    cos = jnp.cos(freqs)
    sin = jnp.sin(freqs)
    cos_h = jnp.concatenate(
        [cos, cos, jnp.ones((SEQ, HEAD_SIZE - ROT), jnp.float32)], axis=-1)   # [S, HS]
    sin_h = jnp.concatenate(
        [sin, sin, jnp.zeros((SEQ, HEAD_SIZE - ROT), jnp.float32)], axis=-1)
    cos_qk = jnp.tile(cos_h, (1, 2 * NUM_HEADS))                             # [S, 64]
    sin_qk = jnp.tile(sin_h, (1, 2 * NUM_HEADS))
    scale = jnp.float32(HEAD_SIZE) ** -0.5
    qk_scale = jnp.concatenate(
        [jnp.full((1, HIDDEN), scale, jnp.float32),
         jnp.ones((1, HIDDEN), jnp.float32)], axis=-1)                       # [1, 64]
    zeros = jnp.zeros((SEQ, ROPE_LANES - QK), jnp.float32)                   # [S, 64]
    t_cos = jnp.concatenate([cos_qk * qk_scale, zeros], axis=-1)             # [S, 128]
    t_sin = jnp.concatenate([sin_qk * qk_scale, zeros], axis=-1)
    return jnp.stack([t_cos, t_sin])                                         # [2, S, 128]


# ---------------- forward pass ----------------
@jax.jit
def phi_model_forward(input_ids, positions, embed, fused):
    h0 = embed[input_ids].astype(jnp.float32)     # [S, H] (embedding gather in XLA)
    rope = _rope_tables(positions)

    zero2 = lambda i: (0, 0)
    zero3 = lambda i: (0, 0, 0)

    return pl.pallas_call(
        phi_kernel,
        out_shape=jax.ShapeDtypeStruct((SEQ, HIDDEN), jnp.float32),
        grid=(1,),
        in_specs=[
            pl.BlockSpec((SEQ, HIDDEN), zero2),                       # h0
            pl.BlockSpec((NUM_LAYERS, 1, HIDDEN), zero3),             # ln_g
            pl.BlockSpec((NUM_LAYERS, 1, HIDDEN), zero3),             # ln_b
            pl.BlockSpec((NUM_LAYERS, HIDDEN, W_IN), zero3),          # w_in  (bf16)
            pl.BlockSpec((NUM_LAYERS, 1, W_IN), zero3),               # b_in
            pl.BlockSpec((NUM_LAYERS, N_INNER, HIDDEN), zero3),       # w_fc2 (bf16)
            pl.BlockSpec((NUM_LAYERS, HIDDEN, HIDDEN), zero3),        # w_d   (bf16)
            pl.BlockSpec((NUM_LAYERS, 1, HIDDEN), zero3),             # b_out
            pl.BlockSpec((2, SEQ, ROPE_LANES), zero3),                # rope
            pl.BlockSpec((1, HIDDEN), zero2),                         # final ln gamma
            pl.BlockSpec((1, HIDDEN), zero2),                         # final ln beta
        ],
        out_specs=pl.BlockSpec((SEQ, HIDDEN), zero2),
        compiler_params=pltpu.CompilerParams(
            dimension_semantics=("arbitrary",)),
    )(h0, fused["ln_g"], fused["ln_b"], fused["w_in"], fused["b_in"],
      fused["w_fc2"], fused["w_d"], fused["b_out"], rope,
      fused["fg"], fused["fb"])


# ---------------- pure-JAX reference (torch semantics, f32) ----------------
def phi_forward_ref(input_ids, positions, embed, layers, fg, fb):
    hi = jax.lax.Precision.HIGHEST
    h = embed[input_ids].astype(jnp.float32)
    inv_freq = 1.0 / (ROPE_THETA ** (jnp.arange(0, ROT, 2, dtype=jnp.float32) / ROT))
    freqs = positions.astype(jnp.float32)[:, None] * inv_freq[None, :]
    cos = jnp.cos(freqs)[:, None, :]
    sin = jnp.sin(freqs)[:, None, :]

    def ln(x, g, b):
        mu = jnp.mean(x, -1, keepdims=True)
        var = jnp.mean((x - mu) ** 2, -1, keepdims=True)
        return (x - mu) * jax.lax.rsqrt(var + EPS) * g + b

    def gelu_new(x):
        c = 0.7978845608028654
        return 0.5 * x * (1.0 + jnp.tanh(c * (x + 0.044715 * x ** 3)))

    def rope(x):
        x1, x2, xp = x[..., :ROT // 2], x[..., ROT // 2:ROT], x[..., ROT:]
        return jnp.concatenate([x1 * cos - x2 * sin, x2 * cos + x1 * sin, xp], -1)

    for p in layers:
        hn = ln(h, p["ln_g"], p["ln_b"])
        qkv = jnp.dot(hn, p["wqkv"], precision=hi) + p["bqkv"]
        q, k, v = jnp.split(qkv, 3, axis=-1)
        q = rope(q.reshape(SEQ, NUM_HEADS, HEAD_SIZE))
        k = rope(k.reshape(SEQ, NUM_HEADS, HEAD_SIZE))
        v = v.reshape(SEQ, NUM_HEADS, HEAD_SIZE)
        s = jnp.einsum('qhd,khd->hqk', q, k, precision=hi) * (HEAD_SIZE ** -0.5)
        mask = jnp.tril(jnp.ones((SEQ, SEQ), bool))
        s = jnp.where(mask[None], s, -jnp.inf)
        pa = jax.nn.softmax(s, axis=-1)
        attn = jnp.einsum('hqk,khd->qhd', pa, v, precision=hi).reshape(SEQ, HIDDEN)
        attn_out = jnp.dot(attn, p["wd"], precision=hi) + p["bd"]
        mlp = jnp.dot(gelu_new(jnp.dot(hn, p["wfc1"], precision=hi) + p["bfc1"]),
                      p["wfc2"], precision=hi) + p["bfc2"]
        h = attn_out + mlp + h
    return ln(h, fg, fb)


if __name__ == "__main__":
    key = jax.random.PRNGKey(0)
    k_param, k_ids = jax.random.split(key)

    embed, layers, fg, fb = make_params(k_param)
    fused = prepare_fused_weights(layers, fg, fb)

    input_ids = jax.random.randint(k_ids, (SEQ,), 0, VOCAB, dtype=jnp.int32)
    positions = jnp.arange(SEQ, dtype=jnp.int32)

    out = phi_model_forward(input_ids, positions, embed, fused)
    out = jax.block_until_ready(out)
    assert out.shape == (SEQ, HIDDEN) and out.dtype == jnp.float32
    assert bool(jnp.all(jnp.isfinite(out)))

    ref = phi_forward_ref(input_ids, positions, embed, layers, fg, fb)
    max_err = float(jnp.max(jnp.abs(out - ref)))
    # tolerance covers bf16 matmul operands + approx-reciprocal softmax
    assert max_err < 3e-2, f"mismatch vs reference: max_err={max_err}"

    print("KERNEL_OK")
</pallas_src>

<mosaic_0001>
module attributes {stable_mosaic.version = 11 : i64} {
  func.func @phi_kernel(%arg0: i32, %arg1: memref<8x32xf32, #tpu.memory_space<vmem>>, %arg2: memref<2x1x32xf32, #tpu.memory_space<vmem>>, %arg3: memref<2x1x32xf32, #tpu.memory_space<vmem>>, %arg4: memref<2x32x288xbf16, #tpu.memory_space<vmem>>, %arg5: memref<2x1x288xf32, #tpu.memory_space<vmem>>, %arg6: memref<2x128x32xbf16, #tpu.memory_space<vmem>>, %arg7: memref<2x32x32xbf16, #tpu.memory_space<vmem>>, %arg8: memref<2x1x32xf32, #tpu.memory_space<vmem>>, %arg9: memref<2x8x128xf32, #tpu.memory_space<vmem>>, %arg10: memref<1x32xf32, #tpu.memory_space<vmem>>, %arg11: memref<1x32xf32, #tpu.memory_space<vmem>>, %arg12: memref<8x32xf32, #tpu.memory_space<vmem>>) attributes {dimension_semantics = [#tpu.dimension_semantics<arbitrary>], iteration_bounds = array<i64: 1>, scalar_prefetch = 0 : i64, scratch_operands = 0 : i64, tpu.core_type = #tpu.core_type<tc>, window_params = [{pipeline_mode = #tpu.pipeline_mode<synchronous>, transform_indices = @transform_0, window_bounds = array<i64: 8, 32>}, {pipeline_mode = #tpu.pipeline_mode<synchronous>, transform_indices = @transform_1, window_bounds = array<i64: 2, 1, 32>}, {pipeline_mode = #tpu.pipeline_mode<synchronous>, transform_indices = @transform_2, window_bounds = array<i64: 2, 1, 32>}, {pipeline_mode = #tpu.pipeline_mode<synchronous>, transform_indices = @transform_3, window_bounds = array<i64: 2, 32, 288>}, {pipeline_mode = #tpu.pipeline_mode<synchronous>, transform_indices = @transform_4, window_bounds = array<i64: 2, 1, 288>}, {pipeline_mode = #tpu.pipeline_mode<synchronous>, transform_indices = @transform_5, window_bounds = array<i64: 2, 128, 32>}, {pipeline_mode = #tpu.pipeline_mode<synchronous>, transform_indices = @transform_6, window_bounds = array<i64: 2, 32, 32>}, {pipeline_mode = #tpu.pipeline_mode<synchronous>, transform_indices = @transform_7, window_bounds = array<i64: 2, 1, 32>}, {pipeline_mode = #tpu.pipeline_mode<synchronous>, transform_indices = @transform_8, window_bounds = array<i64: 2, 8, 128>}, {pipeline_mode = #tpu.pipeline_mode<synchronous>, transform_indices = @transform_9, window_bounds = array<i64: 1, 32>}, {pipeline_mode = #tpu.pipeline_mode<synchronous>, transform_indices = @transform_10, window_bounds = array<i64: 1, 32>}, {pipeline_mode = #tpu.pipeline_mode<synchronous>, transform_indices = @transform_11, window_bounds = array<i64: 8, 32>}]} {
    %0 = tpu.iota {dimensions = array<i32: 0>} : vector<8x8xi32>
    %1 = tpu.iota {dimensions = array<i32: 1>} : vector<8x8xi32>
    %2 = arith.cmpi sge, %0, %1 : vector<8x8xi32>
    %cst = arith.constant 0.000000e+00 : f32
    %cst_0 = arith.constant -1.000000e+30 : f32
    %3 = vector.broadcast %cst : f32 to vector<8x8xf32>
    %4 = vector.broadcast %cst_0 : f32 to vector<8x8xf32>
    %5 = arith.select %2, %3, %4 : vector<8x8xi1>, vector<8x8xf32>
    %c0 = arith.constant 0 : index
    %c0_1 = arith.constant 0 : index
    %c0_2 = arith.constant 0 : index
    %6 = vector.load %arg9[%c0, %c0_1, %c0_2] : memref<2x8x128xf32, #tpu.memory_space<vmem>>, vector<1x8x128xf32>
    %7 = vector.shape_cast %6 : vector<1x8x128xf32> to vector<8x128xf32>
    %c1 = arith.constant 1 : index
    %c0_3 = arith.constant 0 : index
    %c0_4 = arith.constant 0 : index
    %8 = vector.load %arg9[%c1, %c0_3, %c0_4] : memref<2x8x128xf32, #tpu.memory_space<vmem>>, vector<1x8x128xf32>
    %9 = vector.shape_cast %8 : vector<1x8x128xf32> to vector<8x128xf32>
    %c0_5 = arith.constant 0 : index
    %c0_6 = arith.constant 0 : index
    %10 = vector.load %arg1[%c0_5, %c0_6] : memref<8x32xf32, #tpu.memory_space<vmem>>, vector<8x32xf32>
    %c0_7 = arith.constant 0 : index
    %c0_8 = arith.constant 0 : index
    %c0_9 = arith.constant 0 : index
    %11 = vector.load %arg2[%c0_7, %c0_8, %c0_9] : memref<2x1x32xf32, #tpu.memory_space<vmem>>, vector<1x1x32xf32>
    %12 = vector.shape_cast %11 : vector<1x1x32xf32> to vector<1x32xf32>
    %c0_10 = arith.constant 0 : index
    %c0_11 = arith.constant 0 : index
    %c0_12 = arith.constant 0 : index
    %13 = vector.load %arg3[%c0_10, %c0_11, %c0_12] : memref<2x1x32xf32, #tpu.memory_space<vmem>>, vector<1x1x32xf32>
    %14 = vector.shape_cast %13 : vector<1x1x32xf32> to vector<1x32xf32>
    %cst_13 = arith.constant dense<0.000000e+00> : vector<8xf32>
    %15 = vector.multi_reduction <add>, %10, %cst_13 [1] : vector<8x32xf32> to vector<8xf32>
    %16 = vector.shape_cast %15 : vector<8xf32> to vector<8x1xf32>
    %cst_14 = arith.constant 3.200000e+01 : f32
    %17 = vector.broadcast %cst_14 : f32 to vector<8x1xf32>
    %18 = arith.divf %16, %17 : vector<8x1xf32>
    %19 = vector.broadcast %18 : vector<8x1xf32> to vector<8x32xf32>
    %20 = arith.subf %10, %19 : vector<8x32xf32>
    %21 = arith.mulf %20, %20 : vector<8x32xf32>
    %cst_15 = arith.constant dense<0.000000e+00> : vector<8xf32>
    %22 = vector.multi_reduction <add>, %21, %cst_15 [1] : vector<8x32xf32> to vector<8xf32>
    %23 = vector.shape_cast %22 : vector<8xf32> to vector<8x1xf32>
    %cst_16 = arith.constant 3.200000e+01 : f32
    %24 = vector.broadcast %cst_16 : f32 to vector<8x1xf32>
    %25 = arith.divf %23, %24 : vector<8x1xf32>
    %cst_17 = arith.constant 9.99999974E-6 : f32
    %26 = vector.broadcast %cst_17 : f32 to vector<8x1xf32>
    %27 = arith.addf %25, %26 : vector<8x1xf32>
    %28 = math.rsqrt %27 : vector<8x1xf32>
    %29 = vector.broadcast %28 : vector<8x1xf32> to vector<8x32xf32>
    %30 = arith.mulf %20, %29 : vector<8x32xf32>
    %31 = vector.broadcast %12 : vector<1x32xf32> to vector<8x32xf32>
    %32 = arith.mulf %30, %31 : vector<8x32xf32>
    %33 = vector.broadcast %14 : vector<1x32xf32> to vector<8x32xf32>
    %34 = arith.addf %32, %33 : vector<8x32xf32>
    %35 = arith.truncf %34 : vector<8x32xf32> to vector<8x32xbf16>
    %c0_18 = arith.constant 0 : index
    %c0_19 = arith.constant 0 : index
    %c0_20 = arith.constant 0 : index
    %36 = vector.load %arg4[%c0_18, %c0_19, %c0_20] : memref<2x32x288xbf16, #tpu.memory_space<vmem>>, vector<1x32x288xbf16>
    %37 = vector.shape_cast %36 : vector<1x32x288xbf16> to vector<32x288xbf16>
    %cst_21 = arith.constant dense<0.000000e+00> : vector<8x288xf32>
    %38 = tpu.matmul %35, %37, %cst_21 {dimension_numbers = #tpu.dot_dimension_numbers<[1], [0], [0], [1], [0, 0, 1, 1], [], []>} : vector<8x32xbf16>, vector<32x288xbf16>, vector<8x288xf32> -> vector<8x288xf32>
    %c0_22 = arith.constant 0 : index
    %c0_23 = arith.constant 0 : index
    %c0_24 = arith.constant 0 : index
    %39 = vector.load %arg5[%c0_22, %c0_23, %c0_24] : memref<2x1x288xf32, #tpu.memory_space<vmem>>, vector<1x1x288xf32>
    %40 = vector.shape_cast %39 : vector<1x1x288xf32> to vector<1x288xf32>
    %41 = vector.broadcast %40 : vector<1x288xf32> to vector<8x288xf32>
    %42 = arith.addf %38, %41 : vector<8x288xf32>
    %43 = vector.extract_strided_slice %42 {offsets = [0, 128], sizes = [8, 128], strides = [1, 1]} : vector<8x288xf32> to vector<8x128xf32>
    %c64_i32 = arith.constant 64 : i32
    %44 = tpu.dynamic_rotate %43 by %c64_i32 dim 1 : vector<8x128xf32>, i32 -> vector<8x128xf32>
    %45 = arith.mulf %43, %7 : vector<8x128xf32>
    %46 = arith.mulf %44, %9 : vector<8x128xf32>
    %47 = arith.addf %45, %46 : vector<8x128xf32>
    %48 = vector.extract_strided_slice %42 {offsets = [0, 256], sizes = [8, 32], strides = [1, 1]} : vector<8x288xf32> to vector<8x32xf32>
    %c0_25 = arith.constant 0 : index
    %c0_26 = arith.constant 0 : index
    %c0_27 = arith.constant 0 : index
    %49 = vector.load %arg7[%c0_25, %c0_26, %c0_27] : memref<2x32x32xbf16, #tpu.memory_space<vmem>>, vector<1x32x32xbf16>
    %50 = vector.shape_cast %49 : vector<1x32x32xbf16> to vector<32x32xbf16>
    %51 = vector.extract_strided_slice %47 {offsets = [0, 0], sizes = [8, 8], strides = [1, 1]} : vector<8x128xf32> to vector<8x8xf32>
    %52 = vector.extract_strided_slice %47 {offsets = [0, 32], sizes = [8, 8], strides = [1, 1]} : vector<8x128xf32> to vector<8x8xf32>
    %53 = vector.extract_strided_slice %48 {offsets = [0, 0], sizes = [8, 8], strides = [1, 1]} : vector<8x32xf32> to vector<8x8xf32>
    %54 = arith.truncf %51 : vector<8x8xf32> to vector<8x8xbf16>
    %55 = arith.truncf %52 : vector<8x8xf32> to vector<8x8xbf16>
    %cst_28 = arith.constant dense<0.000000e+00> : vector<8x8xf32>
    %56 = tpu.matmul %54, %55, %cst_28 {dimension_numbers = #tpu.dot_dimension_numbers<[1], [1], [0], [0], [0, 0, 1, 0], [], []>} : vector<8x8xbf16>, vector<8x8xbf16>, vector<8x8xf32> -> vector<8x8xf32>
    %57 = arith.addf %56, %5 : vector<8x8xf32>
    %cst_29 = arith.constant dense<0xFF800000> : vector<8xf32>
    %58 = vector.multi_reduction <maximumf>, %57, %cst_29 [1] : vector<8x8xf32> to vector<8xf32>
    %59 = vector.shape_cast %58 : vector<8xf32> to vector<8x1xf32>
    %60 = vector.broadcast %59 : vector<8x1xf32> to vector<8x8xf32>
    %61 = arith.subf %57, %60 : vector<8x8xf32>
    %62 = math.exp %61 : vector<8x8xf32>
    %cst_30 = arith.constant dense<0.000000e+00> : vector<8xf32>
    %63 = vector.multi_reduction <add>, %62, %cst_30 [1] : vector<8x8xf32> to vector<8xf32>
    %64 = vector.shape_cast %63 : vector<8xf32> to vector<8x1xf32>
    %65 = tpu.reciprocal %64 {approx = true} : vector<8x1xf32> -> vector<8x1xf32>
    %66 = vector.broadcast %65 : vector<8x1xf32> to vector<8x8xf32>
    %67 = arith.mulf %62, %66 : vector<8x8xf32>
    %68 = arith.truncf %67 : vector<8x8xf32> to vector<8x8xbf16>
    %69 = arith.truncf %53 : vector<8x8xf32> to vector<8x8xbf16>
    %cst_31 = arith.constant dense<0.000000e+00> : vector<8x8xf32>
    %70 = tpu.matmul %68, %69, %cst_31 {dimension_numbers = #tpu.dot_dimension_numbers<[1], [0], [0], [1], [0, 0, 1, 1], [], []>} : vector<8x8xbf16>, vector<8x8xbf16>, vector<8x8xf32> -> vector<8x8xf32>
    %71 = vector.extract_strided_slice %50 {offsets = [0, 0], sizes = [8, 32], strides = [1, 1]} : vector<32x32xbf16> to vector<8x32xbf16>
    %72 = arith.truncf %70 : vector<8x8xf32> to vector<8x8xbf16>
    %cst_32 = arith.constant dense<0.000000e+00> : vector<8x32xf32>
    %73 = tpu.matmul %72, %71, %cst_32 {dimension_numbers = #tpu.dot_dimension_numbers<[1], [0], [0], [1], [0, 0, 1, 1], [], []>} : vector<8x8xbf16>, vector<8x32xbf16>, vector<8x32xf32> -> vector<8x32xf32>
    %74 = vector.extract_strided_slice %47 {offsets = [0, 8], sizes = [8, 8], strides = [1, 1]} : vector<8x128xf32> to vector<8x8xf32>
    %75 = vector.extract_strided_slice %47 {offsets = [0, 40], sizes = [8, 8], strides = [1, 1]} : vector<8x128xf32> to vector<8x8xf32>
    %76 = vector.extract_strided_slice %48 {offsets = [0, 8], sizes = [8, 8], strides = [1, 1]} : vector<8x32xf32> to vector<8x8xf32>
    %77 = arith.truncf %74 : vector<8x8xf32> to vector<8x8xbf16>
    %78 = arith.truncf %75 : vector<8x8xf32> to vector<8x8xbf16>
    %cst_33 = arith.constant dense<0.000000e+00> : vector<8x8xf32>
    %79 = tpu.matmul %77, %78, %cst_33 {dimension_numbers = #tpu.dot_dimension_numbers<[1], [1], [0], [0], [0, 0, 1, 0], [], []>} : vector<8x8xbf16>, vector<8x8xbf16>, vector<8x8xf32> -> vector<8x8xf32>
    %80 = arith.addf %79, %5 : vector<8x8xf32>
    %cst_34 = arith.constant dense<0xFF800000> : vector<8xf32>
    %81 = vector.multi_reduction <maximumf>, %80, %cst_34 [1] : vector<8x8xf32> to vector<8xf32>
    %82 = vector.shape_cast %81 : vector<8xf32> to vector<8x1xf32>
    %83 = vector.broadcast %82 : vector<8x1xf32> to vector<8x8xf32>
    %84 = arith.subf %80, %83 : vector<8x8xf32>
    %85 = math.exp %84 : vector<8x8xf32>
    %cst_35 = arith.constant dense<0.000000e+00> : vector<8xf32>
    %86 = vector.multi_reduction <add>, %85, %cst_35 [1] : vector<8x8xf32> to vector<8xf32>
    %87 = vector.shape_cast %86 : vector<8xf32> to vector<8x1xf32>
    %88 = tpu.reciprocal %87 {approx = true} : vector<8x1xf32> -> vector<8x1xf32>
    %89 = vector.broadcast %88 : vector<8x1xf32> to vector<8x8xf32>
    %90 = arith.mulf %85, %89 : vector<8x8xf32>
    %91 = arith.truncf %90 : vector<8x8xf32> to vector<8x8xbf16>
    %92 = arith.truncf %76 : vector<8x8xf32> to vector<8x8xbf16>
    %cst_36 = arith.constant dense<0.000000e+00> : vector<8x8xf32>
    %93 = tpu.matmul %91, %92, %cst_36 {dimension_numbers = #tpu.dot_dimension_numbers<[1], [0], [0], [1], [0, 0, 1, 1], [], []>} : vector<8x8xbf16>, vector<8x8xbf16>, vector<8x8xf32> -> vector<8x8xf32>
    %94 = vector.extract_strided_slice %50 {offsets = [8, 0], sizes = [8, 32], strides = [1, 1]} : vector<32x32xbf16> to vector<8x32xbf16>
    %95 = arith.truncf %93 : vector<8x8xf32> to vector<8x8xbf16>
    %cst_37 = arith.constant dense<0.000000e+00> : vector<8x32xf32>
    %96 = tpu.matmul %95, %94, %cst_37 {dimension_numbers = #tpu.dot_dimension_numbers<[1], [0], [0], [1], [0, 0, 1, 1], [], []>} : vector<8x8xbf16>, vector<8x32xbf16>, vector<8x32xf32> -> vector<8x32xf32>
    %97 = arith.addf %73, %96 : vector<8x32xf32>
    %98 = vector.extract_strided_slice %47 {offsets = [0, 16], sizes = [8, 8], strides = [1, 1]} : vector<8x128xf32> to vector<8x8xf32>
    %99 = vector.extract_strided_slice %47 {offsets = [0, 48], sizes = [8, 8], strides = [1, 1]} : vector<8x128xf32> to vector<8x8xf32>
    %100 = vector.extract_strided_slice %48 {offsets = [0, 16], sizes = [8, 8], strides = [1, 1]} : vector<8x32xf32> to vector<8x8xf32>
    %101 = arith.truncf %98 : vector<8x8xf32> to vector<8x8xbf16>
    %102 = arith.truncf %99 : vector<8x8xf32> to vector<8x8xbf16>
    %cst_38 = arith.constant dense<0.000000e+00> : vector<8x8xf32>
    %103 = tpu.matmul %101, %102, %cst_38 {dimension_numbers = #tpu.dot_dimension_numbers<[1], [1], [0], [0], [0, 0, 1, 0], [], []>} : vector<8x8xbf16>, vector<8x8xbf16>, vector<8x8xf32> -> vector<8x8xf32>
    %104 = arith.addf %103, %5 : vector<8x8xf32>
    %cst_39 = arith.constant dense<0xFF800000> : vector<8xf32>
    %105 = vector.multi_reduction <maximumf>, %104, %cst_39 [1] : vector<8x8xf32> to vector<8xf32>
    %106 = vector.shape_cast %105 : vector<8xf32> to vector<8x1xf32>
    %107 = vector.broadcast %106 : vector<8x1xf32> to vector<8x8xf32>
    %108 = arith.subf %104, %107 : vector<8x8xf32>
    %109 = math.exp %108 : vector<8x8xf32>
    %cst_40 = arith.constant dense<0.000000e+00> : vector<8xf32>
    %110 = vector.multi_reduction <add>, %109, %cst_40 [1] : vector<8x8xf32> to vector<8xf32>
    %111 = vector.shape_cast %110 : vector<8xf32> to vector<8x1xf32>
    %112 = tpu.reciprocal %111 {approx = true} : vector<8x1xf32> -> vector<8x1xf32>
    %113 = vector.broadcast %112 : vector<8x1xf32> to vector<8x8xf32>
    %114 = arith.mulf %109, %113 : vector<8x8xf32>
    %115 = arith.truncf %114 : vector<8x8xf32> to vector<8x8xbf16>
    %116 = arith.truncf %100 : vector<8x8xf32> to vector<8x8xbf16>
    %cst_41 = arith.constant dense<0.000000e+00> : vector<8x8xf32>
    %117 = tpu.matmul %115, %116, %cst_41 {dimension_numbers = #tpu.dot_dimension_numbers<[1], [0], [0], [1], [0, 0, 1, 1], [], []>} : vector<8x8xbf16>, vector<8x8xbf16>, vector<8x8xf32> -> vector<8x8xf32>
    %118 = vector.extract_strided_slice %50 {offsets = [16, 0], sizes = [8, 32], strides = [1, 1]} : vector<32x32xbf16> to vector<8x32xbf16>
    %119 = arith.truncf %117 : vector<8x8xf32> to vector<8x8xbf16>
    %cst_42 = arith.constant dense<0.000000e+00> : vector<8x32xf32>
    %120 = tpu.matmul %119, %118, %cst_42 {dimension_numbers = #tpu.dot_dimension_numbers<[1], [0], [0], [1], [0, 0, 1, 1], [], []>} : vector<8x8xbf16>, vector<8x32xbf16>, vector<8x32xf32> -> vector<8x32xf32>
    %121 = arith.addf %97, %120 : vector<8x32xf32>
    %122 = vector.extract_strided_slice %47 {offsets = [0, 24], sizes = [8, 8], strides = [1, 1]} : vector<8x128xf32> to vector<8x8xf32>
    %123 = vector.extract_strided_slice %47 {offsets = [0, 56], sizes = [8, 8], strides = [1, 1]} : vector<8x128xf32> to vector<8x8xf32>
    %124 = vector.extract_strided_slice %48 {offsets = [0, 24], sizes = [8, 8], strides = [1, 1]} : vector<8x32xf32> to vector<8x8xf32>
    %125 = arith.truncf %122 : vector<8x8xf32> to vector<8x8xbf16>
    %126 = arith.truncf %123 : vector<8x8xf32> to vector<8x8xbf16>
    %cst_43 = arith.constant dense<0.000000e+00> : vector<8x8xf32>
    %127 = tpu.matmul %125, %126, %cst_43 {dimension_numbers = #tpu.dot_dimension_numbers<[1], [1], [0], [0], [0, 0, 1, 0], [], []>} : vector<8x8xbf16>, vector<8x8xbf16>, vector<8x8xf32> -> vector<8x8xf32>
    %128 = arith.addf %127, %5 : vector<8x8xf32>
    %cst_44 = arith.constant dense<0xFF800000> : vector<8xf32>
    %129 = vector.multi_reduction <maximumf>, %128, %cst_44 [1] : vector<8x8xf32> to vector<8xf32>
    %130 = vector.shape_cast %129 : vector<8xf32> to vector<8x1xf32>
    %131 = vector.broadcast %130 : vector<8x1xf32> to vector<8x8xf32>
    %132 = arith.subf %128, %131 : vector<8x8xf32>
    %133 = math.exp %132 : vector<8x8xf32>
    %cst_45 = arith.constant dense<0.000000e+00> : vector<8xf32>
    %134 = vector.multi_reduction <add>, %133, %cst_45 [1] : vector<8x8xf32> to vector<8xf32>
    %135 = vector.shape_cast %134 : vector<8xf32> to vector<8x1xf32>
    %136 = tpu.reciprocal %135 {approx = true} : vector<8x1xf32> -> vector<8x1xf32>
    %137 = vector.broadcast %136 : vector<8x1xf32> to vector<8x8xf32>
    %138 = arith.mulf %133, %137 : vector<8x8xf32>
    %139 = arith.truncf %138 : vector<8x8xf32> to vector<8x8xbf16>
    %140 = arith.truncf %124 : vector<8x8xf32> to vector<8x8xbf16>
    %cst_46 = arith.constant dense<0.000000e+00> : vector<8x8xf32>
    %141 = tpu.matmul %139, %140, %cst_46 {dimension_numbers = #tpu.dot_dimension_numbers<[1], [0], [0], [1], [0, 0, 1, 1], [], []>} : vector<8x8xbf16>, vector<8x8xbf16>, vector<8x8xf32> -> vector<8x8xf32>
    %142 = vector.extract_strided_slice %50 {offsets = [24, 0], sizes = [8, 32], strides = [1, 1]} : vector<32x32xbf16> to vector<8x32xbf16>
    %143 = arith.truncf %141 : vector<8x8xf32> to vector<8x8xbf16>
    %cst_47 = arith.constant dense<0.000000e+00> : vector<8x32xf32>
    %144 = tpu.matmul %143, %142, %cst_47 {dimension_numbers = #tpu.dot_dimension_numbers<[1], [0], [0], [1], [0, 0, 1, 1], [], []>} : vector<8x8xbf16>, vector<8x32xbf16>, vector<8x32xf32> -> vector<8x32xf32>
    %145 = arith.addf %121, %144 : vector<8x32xf32>
    %146 = vector.extract_strided_slice %42 {offsets = [0, 0], sizes = [8, 128], strides = [1, 1]} : vector<8x288xf32> to vector<8x128xf32>
    %cst_48 = arith.constant 5.000000e-01 : f32
    %147 = vector.broadcast %cst_48 : f32 to vector<8x128xf32>
    %148 = arith.mulf %147, %146 : vector<8x128xf32>
    %cst_49 = arith.constant 4.471500e-02 : f32
    %149 = vector.broadcast %cst_49 : f32 to vector<8x128xf32>
    %150 = arith.mulf %149, %146 : vector<8x128xf32>
    %151 = arith.mulf %150, %146 : vector<8x128xf32>
    %152 = arith.mulf %151, %146 : vector<8x128xf32>
    %153 = arith.addf %146, %152 : vector<8x128xf32>
    %cst_50 = arith.constant 0.797884583 : f32
    %154 = vector.broadcast %cst_50 : f32 to vector<8x128xf32>
    %155 = arith.mulf %154, %153 : vector<8x128xf32>
    %156 = math.tanh %155 : vector<8x128xf32>
    %cst_51 = arith.constant 1.000000e+00 : f32
    %157 = vector.broadcast %cst_51 : f32 to vector<8x128xf32>
    %158 = arith.addf %157, %156 : vector<8x128xf32>
    %159 = arith.mulf %148, %158 : vector<8x128xf32>
    %160 = arith.truncf %159 : vector<8x128xf32> to vector<8x128xbf16>
    %c0_52 = arith.constant 0 : index
    %c0_53 = arith.constant 0 : index
    %c0_54 = arith.constant 0 : index
    %161 = vector.load %arg6[%c0_52, %c0_53, %c0_54] : memref<2x128x32xbf16, #tpu.memory_space<vmem>>, vector<1x128x32xbf16>
    %162 = vector.shape_cast %161 : vector<1x128x32xbf16> to vector<128x32xbf16>
    %cst_55 = arith.constant dense<0.000000e+00> : vector<8x32xf32>
    %163 = tpu.matmul %160, %162, %cst_55 {dimension_numbers = #tpu.dot_dimension_numbers<[1], [0], [0], [1], [0, 0, 1, 1], [], []>} : vector<8x128xbf16>, vector<128x32xbf16>, vector<8x32xf32> -> vector<8x32xf32>
    %164 = arith.addf %145, %163 : vector<8x32xf32>
    %c0_56 = arith.constant 0 : index
    %c0_57 = arith.constant 0 : index
    %c0_58 = arith.constant 0 : index
    %165 = vector.load %arg8[%c0_56, %c0_57, %c0_58] : memref<2x1x32xf32, #tpu.memory_space<vmem>>, vector<1x1x32xf32>
    %166 = vector.shape_cast %165 : vector<1x1x32xf32> to vector<1x32xf32>
    %167 = vector.broadcast %166 : vector<1x32xf32> to vector<8x32xf32>
    %168 = arith.addf %164, %167 : vector<8x32xf32>
    %169 = arith.addf %168, %10 : vector<8x32xf32>
    %c1_59 = arith.constant 1 : index
    %c0_60 = arith.constant 0 : index
    %c0_61 = arith.constant 0 : index
    %170 = vector.load %arg2[%c1_59, %c0_60, %c0_61] : memref<2x1x32xf32, #tpu.memory_space<vmem>>, vector<1x1x32xf32>
    %171 = vector.shape_cast %170 : vector<1x1x32xf32> to vector<1x32xf32>
    %c1_62 = arith.constant 1 : index
    %c0_63 = arith.constant 0 : index
    %c0_64 = arith.constant 0 : index
    %172 = vector.load %arg3[%c1_62, %c0_63, %c0_64] : memref<2x1x32xf32, #tpu.memory_space<vmem>>, vector<1x1x32xf32>
    %173 = vector.shape_cast %172 : vector<1x1x32xf32> to vector<1x32xf32>
    %cst_65 = arith.constant dense<0.000000e+00> : vector<8xf32>
    %174 = vector.multi_reduction <add>, %169, %cst_65 [1] : vector<8x32xf32> to vector<8xf32>
    %175 = vector.shape_cast %174 : vector<8xf32> to vector<8x1xf32>
    %cst_66 = arith.constant 3.200000e+01 : f32
    %176 = vector.broadcast %cst_66 : f32 to vector<8x1xf32>
    %177 = arith.divf %175, %176 : vector<8x1xf32>
    %178 = vector.broadcast %177 : vector<8x1xf32> to vector<8x32xf32>
    %179 = arith.subf %169, %178 : vector<8x32xf32>
    %180 = arith.mulf %179, %179 : vector<8x32xf32>
    %cst_67 = arith.constant dense<0.000000e+00> : vector<8xf32>
    %181 = vector.multi_reduction <add>, %180, %cst_67 [1] : vector<8x32xf32> to vector<8xf32>
    %182 = vector.shape_cast %181 : vector<8xf32> to vector<8x1xf32>
    %cst_68 = arith.constant 3.200000e+01 : f32
    %183 = vector.broadcast %cst_68 : f32 to vector<8x1xf32>
    %184 = arith.divf %182, %183 : vector<8x1xf32>
    %cst_69 = arith.constant 9.99999974E-6 : f32
    %185 = vector.broadcast %cst_69 : f32 to vector<8x1xf32>
    %186 = arith.addf %184, %185 : vector<8x1xf32>
    %187 = math.rsqrt %186 : vector<8x1xf32>
    %188 = vector.broadcast %187 : vector<8x1xf32> to vector<8x32xf32>
    %189 = arith.mulf %179, %188 : vector<8x32xf32>
    %190 = vector.broadcast %171 : vector<1x32xf32> to vector<8x32xf32>
    %191 = arith.mulf %189, %190 : vector<8x32xf32>
    %192 = vector.broadcast %173 : vector<1x32xf32> to vector<8x32xf32>
    %193 = arith.addf %191, %192 : vector<8x32xf32>
    %194 = arith.truncf %193 : vector<8x32xf32> to vector<8x32xbf16>
    %c1_70 = arith.constant 1 : index
    %c0_71 = arith.constant 0 : index
    %c0_72 = arith.constant 0 : index
    %195 = vector.load %arg4[%c1_70, %c0_71, %c0_72] : memref<2x32x288xbf16, #tpu.memory_space<vmem>>, vector<1x32x288xbf16>
    %196 = vector.shape_cast %195 : vector<1x32x288xbf16> to vector<32x288xbf16>
    %cst_73 = arith.constant dense<0.000000e+00> : vector<8x288xf32>
    %197 = tpu.matmul %194, %196, %cst_73 {dimension_numbers = #tpu.dot_dimension_numbers<[1], [0], [0], [1], [0, 0, 1, 1], [], []>} : vector<8x32xbf16>, vector<32x288xbf16>, vector<8x288xf32> -> vector<8x288xf32>
    %c1_74 = arith.constant 1 : index
    %c0_75 = arith.constant 0 : index
    %c0_76 = arith.constant 0 : index
    %198 = vector.load %arg5[%c1_74, %c0_75, %c0_76] : memref<2x1x288xf32, #tpu.memory_space<vmem>>, vector<1x1x288xf32>
    %199 = vector.shape_cast %198 : vector<1x1x288xf32> to vector<1x288xf32>
    %200 = vector.broadcast %199 : vector<1x288xf32> to vector<8x288xf32>
    %201 = arith.addf %197, %200 : vector<8x288xf32>
    %202 = vector.extract_strided_slice %201 {offsets = [0, 128], sizes = [8, 128], strides = [1, 1]} : vector<8x288xf32> to vector<8x128xf32>
    %c64_i32_77 = arith.constant 64 : i32
    %203 = tpu.dynamic_rotate %202 by %c64_i32_77 dim 1 : vector<8x128xf32>, i32 -> vector<8x128xf32>
    %204 = arith.mulf %202, %7 : vector<8x128xf32>
    %205 = arith.mulf %203, %9 : vector<8x128xf32>
    %206 = arith.addf %204, %205 : vector<8x128xf32>
    %207 = vector.extract_strided_slice %201 {offsets = [0, 256], sizes = [8, 32], strides = [1, 1]} : vector<8x288xf32> to vector<8x32xf32>
    %c1_78 = arith.constant 1 : index
    %c0_79 = arith.constant 0 : index
    %c0_80 = arith.constant 0 : index
    %208 = vector.load %arg7[%c1_78, %c0_79, %c0_80] : memref<2x32x32xbf16, #tpu.memory_space<vmem>>, vector<1x32x32xbf16>
    %209 = vector.shape_cast %208 : vector<1x32x32xbf16> to vector<32x32xbf16>
    %210 = vector.extract_strided_slice %206 {offsets = [0, 0], sizes = [8, 8], strides = [1, 1]} : vector<8x128xf32> to vector<8x8xf32>
    %211 = vector.extract_strided_slice %206 {offsets = [0, 32], sizes = [8, 8], strides = [1, 1]} : vector<8x128xf32> to vector<8x8xf32>
    %212 = vector.extract_strided_slice %207 {offsets = [0, 0], sizes = [8, 8], strides = [1, 1]} : vector<8x32xf32> to vector<8x8xf32>
    %213 = arith.truncf %210 : vector<8x8xf32> to vector<8x8xbf16>
    %214 = arith.truncf %211 : vector<8x8xf32> to vector<8x8xbf16>
    %cst_81 = arith.constant dense<0.000000e+00> : vector<8x8xf32>
    %215 = tpu.matmul %213, %214, %cst_81 {dimension_numbers = #tpu.dot_dimension_numbers<[1], [1], [0], [0], [0, 0, 1, 0], [], []>} : vector<8x8xbf16>, vector<8x8xbf16>, vector<8x8xf32> -> vector<8x8xf32>
    %216 = arith.addf %215, %5 : vector<8x8xf32>
    %cst_82 = arith.constant dense<0xFF800000> : vector<8xf32>
    %217 = vector.multi_reduction <maximumf>, %216, %cst_82 [1] : vector<8x8xf32> to vector<8xf32>
    %218 = vector.shape_cast %217 : vector<8xf32> to vector<8x1xf32>
    %219 = vector.broadcast %218 : vector<8x1xf32> to vector<8x8xf32>
    %220 = arith.subf %216, %219 : vector<8x8xf32>
    %221 = math.exp %220 : vector<8x8xf32>
    %cst_83 = arith.constant dense<0.000000e+00> : vector<8xf32>
    %222 = vector.multi_reduction <add>, %221, %cst_83 [1] : vector<8x8xf32> to vector<8xf32>
    %223 = vector.shape_cast %222 : vector<8xf32> to vector<8x1xf32>
    %224 = tpu.reciprocal %223 {approx = true} : vector<8x1xf32> -> vector<8x1xf32>
    %225 = vector.broadcast %224 : vector<8x1xf32> to vector<8x8xf32>
    %226 = arith.mulf %221, %225 : vector<8x8xf32>
    %227 = arith.truncf %226 : vector<8x8xf32> to vector<8x8xbf16>
    %228 = arith.truncf %212 : vector<8x8xf32> to vector<8x8xbf16>
    %cst_84 = arith.constant dense<0.000000e+00> : vector<8x8xf32>
    %229 = tpu.matmul %227, %228, %cst_84 {dimension_numbers = #tpu.dot_dimension_numbers<[1], [0], [0], [1], [0, 0, 1, 1], [], []>} : vector<8x8xbf16>, vector<8x8xbf16>, vector<8x8xf32> -> vector<8x8xf32>
    %230 = vector.extract_strided_slice %209 {offsets = [0, 0], sizes = [8, 32], strides = [1, 1]} : vector<32x32xbf16> to vector<8x32xbf16>
    %231 = arith.truncf %229 : vector<8x8xf32> to vector<8x8xbf16>
    %cst_85 = arith.constant dense<0.000000e+00> : vector<8x32xf32>
    %232 = tpu.matmul %231, %230, %cst_85 {dimension_numbers = #tpu.dot_dimension_numbers<[1], [0], [0], [1], [0, 0, 1, 1], [], []>} : vector<8x8xbf16>, vector<8x32xbf16>, vector<8x32xf32> -> vector<8x32xf32>
    %233 = vector.extract_strided_slice %206 {offsets = [0, 8], sizes = [8, 8], strides = [1, 1]} : vector<8x128xf32> to vector<8x8xf32>
    %234 = vector.extract_strided_slice %206 {offsets = [0, 40], sizes = [8, 8], strides = [1, 1]} : vector<8x128xf32> to vector<8x8xf32>
    %235 = vector.extract_strided_slice %207 {offsets = [0, 8], sizes = [8, 8], strides = [1, 1]} : vector<8x32xf32> to vector<8x8xf32>
    %236 = arith.truncf %233 : vector<8x8xf32> to vector<8x8xbf16>
    %237 = arith.truncf %234 : vector<8x8xf32> to vector<8x8xbf16>
    %cst_86 = arith.constant dense<0.000000e+00> : vector<8x8xf32>
    %238 = tpu.matmul %236, %237, %cst_86 {dimension_numbers = #tpu.dot_dimension_numbers<[1], [1], [0], [0], [0, 0, 1, 0], [], []>} : vector<8x8xbf16>, vector<8x8xbf16>, vector<8x8xf32> -> vector<8x8xf32>
    %239 = arith.addf %238, %5 : vector<8x8xf32>
    %cst_87 = arith.constant dense<0xFF800000> : vector<8xf32>
    %240 = vector.multi_reduction <maximumf>, %239, %cst_87 [1] : vector<8x8xf32> to vector<8xf32>
    %241 = vector.shape_cast %240 : vector<8xf32> to vector<8x1xf32>
    %242 = vector.broadcast %241 : vector<8x1xf32> to vector<8x8xf32>
    %243 = arith.subf %239, %242 : vector<8x8xf32>
    %244 = math.exp %243 : vector<8x8xf32>
    %cst_88 = arith.constant dense<0.000000e+00> : vector<8xf32>
    %245 = vector.multi_reduction <add>, %244, %cst_88 [1] : vector<8x8xf32> to vector<8xf32>
    %246 = vector.shape_cast %245 : vector<8xf32> to vector<8x1xf32>
    %247 = tpu.reciprocal %246 {approx = true} : vector<8x1xf32> -> vector<8x1xf32>
    %248 = vector.broadcast %247 : vector<8x1xf32> to vector<8x8xf32>
    %249 = arith.mulf %244, %248 : vector<8x8xf32>
    %250 = arith.truncf %249 : vector<8x8xf32> to vector<8x8xbf16>
    %251 = arith.truncf %235 : vector<8x8xf32> to vector<8x8xbf16>
    %cst_89 = arith.constant dense<0.000000e+00> : vector<8x8xf32>
    %252 = tpu.matmul %250, %251, %cst_89 {dimension_numbers = #tpu.dot_dimension_numbers<[1], [0], [0], [1], [0, 0, 1, 1], [], []>} : vector<8x8xbf16>, vector<8x8xbf16>, vector<8x8xf32> -> vector<8x8xf32>
    %253 = vector.extract_strided_slice %209 {offsets = [8, 0], sizes = [8, 32], strides = [1, 1]} : vector<32x32xbf16> to vector<8x32xbf16>
    %254 = arith.truncf %252 : vector<8x8xf32> to vector<8x8xbf16>
    %cst_90 = arith.constant dense<0.000000e+00> : vector<8x32xf32>
    %255 = tpu.matmul %254, %253, %cst_90 {dimension_numbers = #tpu.dot_dimension_numbers<[1], [0], [0], [1], [0, 0, 1, 1], [], []>} : vector<8x8xbf16>, vector<8x32xbf16>, vector<8x32xf32> -> vector<8x32xf32>
    %256 = arith.addf %232, %255 : vector<8x32xf32>
    %257 = vector.extract_strided_slice %206 {offsets = [0, 16], sizes = [8, 8], strides = [1, 1]} : vector<8x128xf32> to vector<8x8xf32>
    %258 = vector.extract_strided_slice %206 {offsets = [0, 48], sizes = [8, 8], strides = [1, 1]} : vector<8x128xf32> to vector<8x8xf32>
    %259 = vector.extract_strided_slice %207 {offsets = [0, 16], sizes = [8, 8], strides = [1, 1]} : vector<8x32xf32> to vector<8x8xf32>
    %260 = arith.truncf %257 : vector<8x8xf32> to vector<8x8xbf16>
    %261 = arith.truncf %258 : vector<8x8xf32> to vector<8x8xbf16>
    %cst_91 = arith.constant dense<0.000000e+00> : vector<8x8xf32>
    %262 = tpu.matmul %260, %261, %cst_91 {dimension_numbers = #tpu.dot_dimension_numbers<[1], [1], [0], [0], [0, 0, 1, 0], [], []>} : vector<8x8xbf16>, vector<8x8xbf16>, vector<8x8xf32> -> vector<8x8xf32>
    %263 = arith.addf %262, %5 : vector<8x8xf32>
    %cst_92 = arith.constant dense<0xFF800000> : vector<8xf32>
    %264 = vector.multi_reduction <maximumf>, %263, %cst_92 [1] : vector<8x8xf32> to vector<8xf32>
    %265 = vector.shape_cast %264 : vector<8xf32> to vector<8x1xf32>
    %266 = vector.broadcast %265 : vector<8x1xf32> to vector<8x8xf32>
    %267 = arith.subf %263, %266 : vector<8x8xf32>
    %268 = math.exp %267 : vector<8x8xf32>
    %cst_93 = arith.constant dense<0.000000e+00> : vector<8xf32>
    %269 = vector.multi_reduction <add>, %268, %cst_93 [1] : vector<8x8xf32> to vector<8xf32>
    %270 = vector.shape_cast %269 : vector<8xf32> to vector<8x1xf32>
    %271 = tpu.reciprocal %270 {approx = true} : vector<8x1xf32> -> vector<8x1xf32>
    %272 = vector.broadcast %271 : vector<8x1xf32> to vector<8x8xf32>
    %273 = arith.mulf %268, %272 : vector<8x8xf32>
    %274 = arith.truncf %273 : vector<8x8xf32> to vector<8x8xbf16>
    %275 = arith.truncf %259 : vector<8x8xf32> to vector<8x8xbf16>
    %cst_94 = arith.constant dense<0.000000e+00> : vector<8x8xf32>
    %276 = tpu.matmul %274, %275, %cst_94 {dimension_numbers = #tpu.dot_dimension_numbers<[1], [0], [0], [1], [0, 0, 1, 1], [], []>} : vector<8x8xbf16>, vector<8x8xbf16>, vector<8x8xf32> -> vector<8x8xf32>
    %277 = vector.extract_strided_slice %209 {offsets = [16, 0], sizes = [8, 32], strides = [1, 1]} : vector<32x32xbf16> to vector<8x32xbf16>
    %278 = arith.truncf %276 : vector<8x8xf32> to vector<8x8xbf16>
    %cst_95 = arith.constant dense<0.000000e+00> : vector<8x32xf32>
    %279 = tpu.matmul %278, %277, %cst_95 {dimension_numbers = #tpu.dot_dimension_numbers<[1], [0], [0], [1], [0, 0, 1, 1], [], []>} : vector<8x8xbf16>, vector<8x32xbf16>, vector<8x32xf32> -> vector<8x32xf32>
    %280 = arith.addf %256, %279 : vector<8x32xf32>
    %281 = vector.extract_strided_slice %206 {offsets = [0, 24], sizes = [8, 8], strides = [1, 1]} : vector<8x128xf32> to vector<8x8xf32>
    %282 = vector.extract_strided_slice %206 {offsets = [0, 56], sizes = [8, 8], strides = [1, 1]} : vector<8x128xf32> to vector<8x8xf32>
    %283 = vector.extract_strided_slice %207 {offsets = [0, 24], sizes = [8, 8], strides = [1, 1]} : vector<8x32xf32> to vector<8x8xf32>
    %284 = arith.truncf %281 : vector<8x8xf32> to vector<8x8xbf16>
    %285 = arith.truncf %282 : vector<8x8xf32> to vector<8x8xbf16>
    %cst_96 = arith.constant dense<0.000000e+00> : vector<8x8xf32>
    %286 = tpu.matmul %284, %285, %cst_96 {dimension_numbers = #tpu.dot_dimension_numbers<[1], [1], [0], [0], [0, 0, 1, 0], [], []>} : vector<8x8xbf16>, vector<8x8xbf16>, vector<8x8xf32> -> vector<8x8xf32>
    %287 = arith.addf %286, %5 : vector<8x8xf32>
    %cst_97 = arith.constant dense<0xFF800000> : vector<8xf32>
    %288 = vector.multi_reduction <maximumf>, %287, %cst_97 [1] : vector<8x8xf32> to vector<8xf32>
    %289 = vector.shape_cast %288 : vector<8xf32> to vector<8x1xf32>
    %290 = vector.broadcast %289 : vector<8x1xf32> to vector<8x8xf32>
    %291 = arith.subf %287, %290 : vector<8x8xf32>
    %292 = math.exp %291 : vector<8x8xf32>
    %cst_98 = arith.constant dense<0.000000e+00> : vector<8xf32>
    %293 = vector.multi_reduction <add>, %292, %cst_98 [1] : vector<8x8xf32> to vector<8xf32>
    %294 = vector.shape_cast %293 : vector<8xf32> to vector<8x1xf32>
    %295 = tpu.reciprocal %294 {approx = true} : vector<8x1xf32> -> vector<8x1xf32>
    %296 = vector.broadcast %295 : vector<8x1xf32> to vector<8x8xf32>
    %297 = arith.mulf %292, %296 : vector<8x8xf32>
    %298 = arith.truncf %297 : vector<8x8xf32> to vector<8x8xbf16>
    %299 = arith.truncf %283 : vector<8x8xf32> to vector<8x8xbf16>
    %cst_99 = arith.constant dense<0.000000e+00> : vector<8x8xf32>
    %300 = tpu.matmul %298, %299, %cst_99 {dimension_numbers = #tpu.dot_dimension_numbers<[1], [0], [0], [1], [0, 0, 1, 1], [], []>} : vector<8x8xbf16>, vector<8x8xbf16>, vector<8x8xf32> -> vector<8x8xf32>
    %301 = vector.extract_strided_slice %209 {offsets = [24, 0], sizes = [8, 32], strides = [1, 1]} : vector<32x32xbf16> to vector<8x32xbf16>
    %302 = arith.truncf %300 : vector<8x8xf32> to vector<8x8xbf16>
    %cst_100 = arith.constant dense<0.000000e+00> : vector<8x32xf32>
    %303 = tpu.matmul %302, %301, %cst_100 {dimension_numbers = #tpu.dot_dimension_numbers<[1], [0], [0], [1], [0, 0, 1, 1], [], []>} : vector<8x8xbf16>, vector<8x32xbf16>, vector<8x32xf32> -> vector<8x32xf32>
    %304 = arith.addf %280, %303 : vector<8x32xf32>
    %305 = vector.extract_strided_slice %201 {offsets = [0, 0], sizes = [8, 128], strides = [1, 1]} : vector<8x288xf32> to vector<8x128xf32>
    %cst_101 = arith.constant 5.000000e-01 : f32
    %306 = vector.broadcast %cst_101 : f32 to vector<8x128xf32>
    %307 = arith.mulf %306, %305 : vector<8x128xf32>
    %cst_102 = arith.constant 4.471500e-02 : f32
    %308 = vector.broadcast %cst_102 : f32 to vector<8x128xf32>
    %309 = arith.mulf %308, %305 : vector<8x128xf32>
    %310 = arith.mulf %309, %305 : vector<8x128xf32>
    %311 = arith.mulf %310, %305 : vector<8x128xf32>
    %312 = arith.addf %305, %311 : vector<8x128xf32>
    %cst_103 = arith.constant 0.797884583 : f32
    %313 = vector.broadcast %cst_103 : f32 to vector<8x128xf32>
    %314 = arith.mulf %313, %312 : vector<8x128xf32>
    %315 = math.tanh %314 : vector<8x128xf32>
    %cst_104 = arith.constant 1.000000e+00 : f32
    %316 = vector.broadcast %cst_104 : f32 to vector<8x128xf32>
    %317 = arith.addf %316, %315 : vector<8x128xf32>
    %318 = arith.mulf %307, %317 : vector<8x128xf32>
    %319 = arith.truncf %318 : vector<8x128xf32> to vector<8x128xbf16>
    %c1_105 = arith.constant 1 : index
    %c0_106 = arith.constant 0 : index
    %c0_107 = arith.constant 0 : index
    %320 = vector.load %arg6[%c1_105, %c0_106, %c0_107] : memref<2x128x32xbf16, #tpu.memory_space<vmem>>, vector<1x128x32xbf16>
    %321 = vector.shape_cast %320 : vector<1x128x32xbf16> to vector<128x32xbf16>
    %cst_108 = arith.constant dense<0.000000e+00> : vector<8x32xf32>
    %322 = tpu.matmul %319, %321, %cst_108 {dimension_numbers = #tpu.dot_dimension_numbers<[1], [0], [0], [1], [0, 0, 1, 1], [], []>} : vector<8x128xbf16>, vector<128x32xbf16>, vector<8x32xf32> -> vector<8x32xf32>
    %323 = arith.addf %304, %322 : vector<8x32xf32>
    %c1_109 = arith.constant 1 : index
    %c0_110 = arith.constant 0 : index
    %c0_111 = arith.constant 0 : index
    %324 = vector.load %arg8[%c1_109, %c0_110, %c0_111] : memref<2x1x32xf32, #tpu.memory_space<vmem>>, vector<1x1x32xf32>
    %325 = vector.shape_cast %324 : vector<1x1x32xf32> to vector<1x32xf32>
    %326 = vector.broadcast %325 : vector<1x32xf32> to vector<8x32xf32>
    %327 = arith.addf %323, %326 : vector<8x32xf32>
    %328 = arith.addf %327, %169 : vector<8x32xf32>
    %c0_112 = arith.constant 0 : index
    %c0_113 = arith.constant 0 : index
    %329 = vector.load %arg10[%c0_112, %c0_113] : memref<1x32xf32, #tpu.memory_space<vmem>>, vector<1x32xf32>
    %c0_114 = arith.constant 0 : index
    %c0_115 = arith.constant 0 : index
    %330 = vector.load %arg11[%c0_114, %c0_115] : memref<1x32xf32, #tpu.memory_space<vmem>>, vector<1x32xf32>
    %cst_116 = arith.constant dense<0.000000e+00> : vector<8xf32>
    %331 = vector.multi_reduction <add>, %328, %cst_116 [1] : vector<8x32xf32> to vector<8xf32>
    %332 = vector.shape_cast %331 : vector<8xf32> to vector<8x1xf32>
    %cst_117 = arith.constant 3.200000e+01 : f32
    %333 = vector.broadcast %cst_117 : f32 to vector<8x1xf32>
    %334 = arith.divf %332, %333 : vector<8x1xf32>
    %335 = vector.broadcast %334 : vector<8x1xf32> to vector<8x32xf32>
    %336 = arith.subf %328, %335 : vector<8x32xf32>
    %337 = arith.mulf %336, %336 : vector<8x32xf32>
    %cst_118 = arith.constant dense<0.000000e+00> : vector<8xf32>
    %338 = vector.multi_reduction <add>, %337, %cst_118 [1] : vector<8x32xf32> to vector<8xf32>
    %339 = vector.shape_cast %338 : vector<8xf32> to vector<8x1xf32>
    %cst_119 = arith.constant 3.200000e+01 : f32
    %340 = vector.broadcast %cst_119 : f32 to vector<8x1xf32>
    %341 = arith.divf %339, %340 : vector<8x1xf32>
    %cst_120 = arith.constant 9.99999974E-6 : f32
    %342 = vector.broadcast %cst_120 : f32 to vector<8x1xf32>
    %343 = arith.addf %341, %342 : vector<8x1xf32>
    %344 = math.rsqrt %343 : vector<8x1xf32>
    %345 = vector.broadcast %344 : vector<8x1xf32> to vector<8x32xf32>
    %346 = arith.mulf %336, %345 : vector<8x32xf32>
    %347 = vector.broadcast %329 : vector<1x32xf32> to vector<8x32xf32>
    %348 = arith.mulf %346, %347 : vector<8x32xf32>
    %349 = vector.broadcast %330 : vector<1x32xf32> to vector<8x32xf32>
    %350 = arith.addf %348, %349 : vector<8x32xf32>
    %c0_121 = arith.constant 0 : index
    %c0_122 = arith.constant 0 : index
    %351 = vector.load %arg12[%c0_121, %c0_122] : memref<8x32xf32, #tpu.memory_space<vmem>>, vector<8x32xf32>
    tpu.vector_store %arg12[%c0_121, %c0_122], %350 {strides = array<i32>} : memref<8x32xf32, #tpu.memory_space<vmem>>, vector<8x32xf32>,
    return
  }
  func.func @transform_0(%arg0: i32) -> (i32, i32) {
    %c0_i32 = arith.constant 0 : i32
    %c0_i32_0 = arith.constant 0 : i32
    %c0_i32_1 = arith.constant 0 : i32
    return %c0_i32, %c0_i32_0 : i32, i32
  }
  func.func @transform_1(%arg0: i32) -> (i32, i32, i32) {
    %c0_i32 = arith.constant 0 : i32
    %c0_i32_0 = arith.constant 0 : i32
    %c0_i32_1 = arith.constant 0 : i32
    %c0_i32_2 = arith.constant 0 : i32
    return %c0_i32, %c0_i32_0, %c0_i32_1 : i32, i32, i32
  }
  func.func @transform_2(%arg0: i32) -> (i32, i32, i32) {
    %c0_i32 = arith.constant 0 : i32
    %c0_i32_0 = arith.constant 0 : i32
    %c0_i32_1 = arith.constant 0 : i32
    %c0_i32_2 = arith.constant 0 : i32
    return %c0_i32, %c0_i32_0, %c0_i32_1 : i32, i32, i32
  }
  func.func @transform_3(%arg0: i32) -> (i32, i32, i32) {
    %c0_i32 = arith.constant 0 : i32
    %c0_i32_0 = arith.constant 0 : i32
    %c0_i32_1 = arith.constant 0 : i32
    %c0_i32_2 = arith.constant 0 : i32
    return %c0_i32, %c0_i32_0, %c0_i32_1 : i32, i32, i32
  }
  func.func @transform_4(%arg0: i32) -> (i32, i32, i32) {
    %c0_i32 = arith.constant 0 : i32
    %c0_i32_0 = arith.constant 0 : i32
    %c0_i32_1 = arith.constant 0 : i32
    %c0_i32_2 = arith.constant 0 : i32
    return %c0_i32, %c0_i32_0, %c0_i32_1 : i32, i32, i32
  }
  func.func @transform_5(%arg0: i32) -> (i32, i32, i32) {
    %c0_i32 = arith.constant 0 : i32
    %c0_i32_0 = arith.constant 0 : i32
    %c0_i32_1 = arith.constant 0 : i32
    %c0_i32_2 = arith.constant 0 : i32
    return %c0_i32, %c0_i32_0, %c0_i32_1 : i32, i32, i32
  }
  func.func @transform_6(%arg0: i32) -> (i32, i32, i32) {
    %c0_i32 = arith.constant 0 : i32
    %c0_i32_0 = arith.constant 0 : i32
    %c0_i32_1 = arith.constant 0 : i32
    %c0_i32_2 = arith.constant 0 : i32
    return %c0_i32, %c0_i32_0, %c0_i32_1 : i32, i32, i32
  }
  func.func @transform_7(%arg0: i32) -> (i32, i32, i32) {
    %c0_i32 = arith.constant 0 : i32
    %c0_i32_0 = arith.constant 0 : i32
    %c0_i32_1 = arith.constant 0 : i32
    %c0_i32_2 = arith.constant 0 : i32
    return %c0_i32, %c0_i32_0, %c0_i32_1 : i32, i32, i32
  }
  func.func @transform_8(%arg0: i32) -> (i32, i32, i32) {
    %c0_i32 = arith.constant 0 : i32
    %c0_i32_0 = arith.constant 0 : i32
    %c0_i32_1 = arith.constant 0 : i32
    %c0_i32_2 = arith.constant 0 : i32
    return %c0_i32, %c0_i32_0, %c0_i32_1 : i32, i32, i32
  }
  func.func @transform_9(%arg0: i32) -> (i32, i32) {
    %c0_i32 = arith.constant 0 : i32
    %c0_i32_0 = arith.constant 0 : i32
    %c0_i32_1 = arith.constant 0 : i32
    return %c0_i32, %c0_i32_0 : i32, i32
  }
  func.func @transform_10(%arg0: i32) -> (i32, i32) {
    %c0_i32 = arith.constant 0 : i32
    %c0_i32_0 = arith.constant 0 : i32
    %c0_i32_1 = arith.constant 0 : i32
    return %c0_i32, %c0_i32_0 : i32, i32
  }
  func.func @transform_11(%arg0: i32) -> (i32, i32) {
    %c0_i32 = arith.constant 0 : i32
    %c0_i32_0 = arith.constant 0 : i32
    %c0_i32_1 = arith.constant 0 : i32
    return %c0_i32, %c0_i32_0 : i32, i32
  }
}

</mosaic_0001>

<llo_original>
// kernel: tile.19
$region0: #{tile.19}
  %s0 = inlined_call_operand.vmem [shape: f32[8,8,8], index: 0, kind: input, shape index: {}]
  %s1 = inlined_call_operand.vmem [shape: f32[8,64], index: 1, kind: output, shape index: {}]
  %v2 = vld [vmem:[%s0] ss:$8 sm:$0xf]
  %v3 = vld [vmem:[%s0] ss:$8 sm:$0xf0]
  %vm4 = vcmask 1047556
  %v5 = vsel %vm4, %v3, %v2
  %vm6 = vcmask 64512
  %7 = vst.msk [vmem:[%s1] sm:$0xff] %vm6, %v5
  %s8 = scalar_lea.vmem %s0, 7
  %v9 = vld [vmem:[%s8] ss:$8 sm:$0xf]
  %s10 = scalar_lea.vmem %s0, 7
  %v11 = vld [vmem:[%s10] ss:$8 sm:$0xf0]
  %vm12 = vcmask 1047556
  %v13 = vsel %vm12, %v11, %v9
  %14 = vrot.lane.b32.xlu0 %v13, 56
  %v15 = vpop.permute.xlu0 %14
  %vm16 = vcmask 523712
  %17 = vst.msk [vmem:[%s1] sm:$0xff] %vm16, %v15
  %s18 = scalar_lea.vmem %s0, 6
  %v19 = vld [vmem:[%s18] ss:$8 sm:$0xf]
  %s20 = scalar_lea.vmem %s0, 6
  %v21 = vld [vmem:[%s20] ss:$8 sm:$0xf0]
  %vm22 = vcmask 1047556
  %v23 = vsel %vm22, %v21, %v19
  %24 = vrot.lane.b32.xlu0 %v23, 48
  %v25 = vpop.permute.xlu0 %24
  %vm26 = vcmask 458112
  %27 = vst.msk [vmem:[%s1] sm:$0xff] %vm26, %v25
  %s28 = scalar_lea.vmem %s0, 5
  %v29 = vld [vmem:[%s28] ss:$8 sm:$0xf]
  %s30 = scalar_lea.vmem %s0, 5
  %v31 = vld [vmem:[%s30] ss:$8 sm:$0xf0]
  %vm32 = vcmask 1047556
  %v33 = vsel %vm32, %v31, %v29
  %34 = vrot.lane.b32.xlu0 %v33, 40
  %v35 = vpop.permute.xlu0 %34
  %vm36 = vcmask 392512
  %37 = vst.msk [vmem:[%s1] sm:$0xff] %vm36, %v35
  %s38 = scalar_lea.vmem %s0, 4
  %v39 = vld [vmem:[%s38] ss:$8 sm:$0xf]
  %s40 = scalar_lea.vmem %s0, 4
  %v41 = vld [vmem:[%s40] ss:$8 sm:$0xf0]
  %vm42 = vcmask 1047556
  %v43 = vsel %vm42, %v41, %v39
  %44 = vrot.lane.b32.xlu0 %v43, 32
  %v45 = vpop.permute.xlu0 %44
  %vm46 = vcmask 326912
  %47 = vst.msk [vmem:[%s1] sm:$0xff] %vm46, %v45
  %s48 = scalar_lea.vmem %s0, 3
  %v49 = vld [vmem:[%s48] ss:$8 sm:$0xf]
  %s50 = scalar_lea.vmem %s0, 3
  %v51 = vld [vmem:[%s50] ss:$8 sm:$0xf0]
  %vm52 = vcmask 1047556
  %v53 = vsel %vm52, %v51, %v49
  %54 = vrot.lane.b32.xlu0 %v53, 24
  %v55 = vpop.permute.xlu0 %54
  %vm56 = vcmask 261312
  %57 = vst.msk [vmem:[%s1] sm:$0xff] %vm56, %v55
  %s58 = scalar_lea.vmem %s0, 2
  %v59 = vld [vmem:[%s58] ss:$8 sm:$0xf]
  %s60 = scalar_lea.vmem %s0, 2
  %v61 = vld [vmem:[%s60] ss:$8 sm:$0xf0]
  %vm62 = vcmask 1047556
  %v63 = vsel %vm62, %v61, %v59
  %64 = vrot.lane.b32.xlu0 %v63, 16
  %v65 = vpop.permute.xlu0 %64
  %vm66 = vcmask 195712
  %67 = vst.msk [vmem:[%s1] sm:$0xff] %vm66, %v65
  %s68 = scalar_lea.vmem %s0, 1
  %v69 = vld [vmem:[%s68] ss:$8 sm:$0xf]
  %s70 = scalar_lea.vmem %s0, 1
  %v71 = vld [vmem:[%s70] ss:$8 sm:$0xf0]
  %vm72 = vcmask 1047556
  %v73 = vsel %vm72, %v71, %v69
  %74 = vrot.lane.b32.xlu0 %v73, 8
  %v75 = vpop.permute.xlu0 %74
  %vm76 = vcmask 130112
  %77 = vst.msk [vmem:[%s1] sm:$0xff] %vm76, %v75

// kernel: phi_model_forward.1
$region0: #{phi_model_forward.1}
  #allocation0 [shape = 'u32[]', space=smem, size = 0x4, offset = 0x4, fixed_abs, tag = 'smem constant byte address 0x4 - core index']
  #allocation1 [shape = 'u32[72,128]{1,0:T(1,128)}', space=vmem, size = 0x9000, scoped, tag = 'internal scratch']
  %s0 = inlined_call_operand.vmem [shape: f32[8,32], index: 0, kind: input, shape index: {}]
  %s1 = inlined_call_operand.vmem [shape: f32[2,1,32], index: 1, kind: input, shape index: {}]
  %s2 = inlined_call_operand.vmem [shape: f32[2,1,32], index: 2, kind: input, shape index: {}]
  %s3 = inlined_call_operand.vmem [shape: bf16[2,32,288], index: 3, kind: input, shape index: {}]
  %s4 = inlined_call_operand.vmem [shape: f32[2,1,288], index: 4, kind: input, shape index: {}]
  %s5 = inlined_call_operand.vmem [shape: bf16[2,128,32], index: 5, kind: input, shape index: {}]
  %s6 = inlined_call_operand.vmem [shape: bf16[2,32,32], index: 6, kind: input, shape index: {}]
  %s7 = inlined_call_operand.vmem [shape: f32[2,1,32], index: 7, kind: input, shape index: {}]
  %s8 = inlined_call_operand.vmem [shape: f32[2,8,128], index: 8, kind: input, shape index: {}]
  %s9 = inlined_call_operand.vmem [shape: f32[1,32], index: 9, kind: input, shape index: {}]
  %s10 = inlined_call_operand.vmem [shape: f32[1,32], index: 10, kind: input, shape index: {}]
  %s11 = inlined_call_operand.hbm [shape: f32[8,32], index: 11, kind: output, shape index: {}]
  %s12 = sld [smem:[#allocation0]]
  $region54: #{phi_model_forward.1} parent=0
    _
  %s14 = ssub.s32 1, %s12
  %s15 = scalar_select 0, %s14, %s12
  $region1: #{phi_model_forward.1} parent=0
    #allocation2 [shape = 'u8[4096]{0}', space=vmem, size = 0x1000, scoped, tag = 'output window, operand 0, single buffered']
    #allocation3 [shape = 's32[1]{0}', space=sflag, size = 0x4, scoped, tag = 'scoped memory for phi_model_forward.1']
    %16 = vsyncpa [#allocation3], 0
    // Predicated region
    $region2: #{phi_model_forward.1} parent=1 // pred_check
      _
    $region3: #{phi_model_forward.1} parent=1 // pred_check_branch
      %18 = sbr.rel (0) target = $region5
    $region4: #{phi_model_forward.1} parent=1 // pred_region
      _
    $region5: #{phi_model_forward.1} parent=1 // pred_fallthru
      _
    // Predicated region
    $region6: #{phi_model_forward.1} parent=1 // pred_check
      _
    $region7: #{phi_model_forward.1} parent=1 // pred_check_branch
      %20 = sbr.rel (0) target = $region9
    $region8: #{phi_model_forward.1} parent=1 // pred_region
      _
    $region9: #{phi_model_forward.1} parent=1 // pred_fallthru
      _
    // Predicated region
    $region10: #{phi_model_forward.1} parent=1 // pred_check
      _
    $region11: #{phi_model_forward.1} parent=1 // pred_check_branch
      %22 = sbr.rel (0) target = $region13
    $region12: #{phi_model_forward.1} parent=1 // pred_region
      _
    $region13: #{phi_model_forward.1} parent=1 // pred_fallthru
      _
    // Predicated region
    $region14: #{phi_model_forward.1} parent=1 // pred_check
      _
    $region15: #{phi_model_forward.1} parent=1 // pred_check_branch
      %24 = sbr.rel (0) target = $region17
    $region16: #{phi_model_forward.1} parent=1 // pred_region
      _
    $region17: #{phi_model_forward.1} parent=1 // pred_fallthru
      _
    // Predicated region
    $region18: #{phi_model_forward.1} parent=1 // pred_check
      _
    $region19: #{phi_model_forward.1} parent=1 // pred_check_branch
      %26 = sbr.rel (0) target = $region21
    $region20: #{phi_model_forward.1} parent=1 // pred_region
      _
    $region21: #{phi_model_forward.1} parent=1 // pred_fallthru
      _
    // Predicated region
    $region22: #{phi_model_forward.1} parent=1 // pred_check
      _
    $region23: #{phi_model_forward.1} parent=1 // pred_check_branch
      %28 = sbr.rel (0) target = $region25
    $region24: #{phi_model_forward.1} parent=1 // pred_region
      _
    $region25: #{phi_model_forward.1} parent=1 // pred_fallthru
      _
    // Predicated region
    $region26: #{phi_model_forward.1} parent=1 // pred_check
      _
    $region27: #{phi_model_forward.1} parent=1 // pred_check_branch
      %30 = sbr.rel (0) target = $region29
    $region28: #{phi_model_forward.1} parent=1 // pred_region
      _
    $region29: #{phi_model_forward.1} parent=1 // pred_fallthru
      _
    // Predicated region
    $region30: #{phi_model_forward.1} parent=1 // pred_check
      _
    $region31: #{phi_model_forward.1} parent=1 // pred_check_branch
      %32 = sbr.rel (0) target = $region33
    $region32: #{phi_model_forward.1} parent=1 // pred_region
      _
    $region33: #{phi_model_forward.1} parent=1 // pred_fallthru
      _
    // Predicated region
    $region34: #{phi_model_forward.1} parent=1 // pred_check
      _
    $region35: #{phi_model_forward.1} parent=1 // pred_check_branch
      %34 = sbr.rel (0) target = $region37
    $region36: #{phi_model_forward.1} parent=1 // pred_region
      _
    $region37: #{phi_model_forward.1} parent=1 // pred_fallthru
      _
    // Predicated region
    $region38: #{phi_model_forward.1} parent=1 // pred_check
      _
    $region39: #{phi_model_forward.1} parent=1 // pred_check_branch
      %36 = sbr.rel (0) target = $region41
    $region40: #{phi_model_forward.1} parent=1 // pred_region
      _
    $region41: #{phi_model_forward.1} parent=1 // pred_fallthru
      _
    // Predicated region
    $region42: #{phi_model_forward.1} parent=1 // pred_check
      _
    $region43: #{phi_model_forward.1} parent=1 // pred_check_branch
      %38 = sbr.rel (0) target = $region45
    $region44: #{phi_model_forward.1} parent=1 // pred_region
      _
    $region45: #{phi_model_forward.1} parent=1 // pred_fallthru
      _
    %v40 = vlaneseq
    %v41 = vshrl.u32 %v40, 7
    %v42 = vlaneseq
    %v43 = vand.u32 %v42, 127
    %vm44 = vcmp.ge.s32.totalorder %v41, %v43
    %v45 = vsel %vm44, 0.0, -1e+30
    %v46 = vld [vmem:[%s8] sm:$0xff]
    %s47 = scalar_lea.vmem %s8, 8
    %v48 = vld [vmem:[%s47] sm:$0xff]
    %v49 = vld [vmem:[%s0] sm:$0xff]
    %v50 = vld [vmem:[%s1] sm:$0x1]
    %v51 = vld [vmem:[%s2] sm:$0x1]
    %vm52 = vcmask 261120
    %v53 = vsel %vm52, %v49, 0.0
    %54 = vadd.xlane.f32.xlu0 %v53
    %v55 = vpop.xlane.xlu0 %54
    %v56 = vrcp.pop 32.0
    %v57 = vmul.f32 32.0, %v56
    %v58 = vsub.f32 1.0, %v57
    %v59 = vmul.f32 %v56, %v58
    %v60 = vadd.f32 %v56, %v59
    %vm61 = vweird.f32 %v56
    %v62 = vsel %vm61, %v56, %v60
    %v63 = vmul.f32 %v55, %v62
    %v64 = vsub.f32 %v49, %v63
    %v65 = vmul.f32 %v64, %v64
    %v66 = vsel %vm52, %v65, 0.0
    %67 = vadd.xlane.f32.xlu0 %v66
    %v68 = vpop.xlane.xlu0 %67
    %v69 = vmul.f32 %v68, %v62
    %v70 = vadd.f32 %v69, 1e-05
    %v71 = vrsqrt.pop %v70
    %v72 = vmul.f32 %v71, %v70
    %v73 = vmul.f32 %v72, %v71
    %v74 = vmul.f32 0.5, %v73
    %v75 = vsub.f32 1.5, %v74
    %v76 = vmul.f32 %v71, %v75
    %vm77 = vweird.f32 %v70
    %vm78 = vweird.f32 %v71
    %vm79 = vmor %vm77, %vm78
    %v80 = vsel %vm79, %v71, %v76
    %v81 = vmul.f32 %v64, %v80
    %v83 = vperm.slane %v50, 0
    %v85 = vmul.f32 %v81, %v83
    %v87 = vperm.slane %v51, 0
    %v89 = vadd.f32 %v85, %v87
    %v90 = vpack.c.bf16 %v89, %v89
    %v91 = vld [vmem:[%s3] sm:$0xff]
    %v92 = vld [vmem:[%s3 + $0x8] sm:$0xf]
    %v93 = vld [vmem:[%s3 + $0xc] sm:$0xff]
    %v94 = vld [vmem:[%s3 + $0x14] sm:$0xf]
    %v95 = vld [vmem:[%s3 + $0x18] sm:$0xff]
    %v96 = vld [vmem:[%s3 + $0x20] sm:$0xf]
    %v97 = vld [vmem:[%s3 + $0x24] sm:$0xff]
    %v98 = vld [vmem:[%s3 + $0x2c] sm:$0xf]
    %v99 = vld [vmem:[%s4] sm:$0x7]
    %v101 = vperm.slane %v99, 0
    %v102 = vperm.slane %v99, 1
    %v103 = vperm.slane %v99, 2
    %v115 = vunpack.c.l.b16 %v91
    %v116 = vunpack.c.h.b16 %v91
    %v117 = vunpack.c.l.b16 %v92
    %v118 = vunpack.c.l.b16 %v93
    %v119 = vunpack.c.h.b16 %v93
    %v120 = vunpack.c.l.b16 %v94
    %v121 = vunpack.c.l.b16 %v95
    %v122 = vunpack.c.h.b16 %v95
    %v123 = vunpack.c.l.b16 %v96
    %v124 = vunpack.c.l.b16 %v97
    %v125 = vunpack.c.h.b16 %v97
    %v126 = vunpack.c.l.b16 %v98
    %v127 = vpack.c.b16 %v118, %v115
    %v128 = vpack.c.b16 %v119, %v116
    %v129 = vpack.c.b16 %v120, %v117
    %v130 = vpack.c.b16 %v124, %v121
    %v131 = vpack.c.b16 %v125, %v122
    %v132 = vpack.c.b16 %v126, %v123
    %v140 = vsel %vm52, %v90, 0
    %142 = vmatpush.bf16.msra.mxu0 0
    %143 = vmatpush.bf16.msra.mxu0 0
    %144 = vmatpush.bf16.msra.mxu0 0
    %145 = vmatpush.bf16.msra.mxu0 0
    %146 = vmatpush.bf16.msra.mxu0 0
    %147 = vmatpush.bf16.msra.mxu0 0
    %148 = vmatpush.bf16.msra.mxu0 %v130
    %149 = vmatpush.bf16.msra.mxu0 %v127
    %150 = vmatmul.bf16.gmra.mxu0 %v140
    %v151 = vpop.f32.mrf.mxu0
    %v152 = vadd.f32 %v101, %v151
    %v153 = vpop.f32.mrf.mxu0
    %154 = vdwg.mxu0
    %155 = vmatpush.bf16.msra.mxu0 0
    %156 = vmatpush.bf16.msra.mxu0 0
    %157 = vmatpush.bf16.msra.mxu0 0
    %158 = vmatpush.bf16.msra.mxu0 0
    %159 = vmatpush.bf16.msra.mxu0 0
    %160 = vmatpush.bf16.msra.mxu0 0
    %161 = vmatpush.bf16.msra.mxu0 %v131
    %162 = vmatpush.bf16.msra.mxu0 %v128
    %163 = vmatmul.bf16.gmra.mxu0 %v140
    %v164 = vpop.f32.mrf.mxu0
    %v165 = vadd.f32 %v102, %v164
    %v166 = vpop.f32.mrf.mxu0
    %167 = vdwg.mxu0
    %168 = vmatpush.bf16.msra.mxu0 0
    %169 = vmatpush.bf16.msra.mxu0 0
    %170 = vmatpush.bf16.msra.mxu0 0
    %171 = vmatpush.bf16.msra.mxu0 0
    %172 = vmatpush.bf16.msra.mxu0 0
    %173 = vmatpush.bf16.msra.mxu0 0
    %174 = vmatpush.bf16.msra.mxu0 %v132
    %175 = vmatpush.bf16.msra.mxu0 %v129
    %176 = vmatmul.bf16.gmra.mxu0 %v140
    %v177 = vpop.f32.mrf.mxu0
    %v178 = vadd.f32 %v103, %v177
    %v179 = vpop.f32.mrf.mxu0
    %180 = vdwg.mxu0
    %181 = vrot.lane.b32.xlu0 %v165, 64
    %v182 = vpop.permute.xlu0 %181
    %v183 = vmul.f32 %v165, %v46
    %v184 = vmul.f32 %v182, %v48
    %v185 = vadd.f32 %v183, %v184
    %v186 = vld [vmem:[%s6] sm:$0xf]
    %v187 = vld [vmem:[%s6 + $0x4] sm:$0xf]
    %v188 = vld [vmem:[%s6 + $0x8] sm:$0xf]
    %v189 = vld [vmem:[%s6 + $0xc] sm:$0xf]
    %v190 = vpack.c.bf16 %v185, %v185
    %192 = vrot.lane.b32.xlu0 %v190, 96
    %v193 = vpop.permute.xlu0 %192
    %vm194 = vcmask 64512
    %v196 = vsel %vm194, %v190, 0
    %v199 = vsel %vm194, %v193, 0
    %201 = vmatpush.bf16.xpose.msra.mxu0 0
    %202 = vmatpush.bf16.xpose.msra.mxu0 0
    %203 = vmatpush.bf16.xpose.msra.mxu0 0
    %204 = vmatpush.bf16.xpose.msra.mxu0 0
    %205 = vmatpush.bf16.xpose.msra.mxu0 0
    %206 = vmatpush.bf16.xpose.msra.mxu0 0
    %207 = vmatpush.bf16.xpose.msra.mxu0 0
    %208 = vmatpush.bf16.xpose.msra.mxu0 %v199
    %209 = vmatmul.bf16.gmra.mxu0 %v196
    %v210 = vpop.f32.mrf.mxu0
    %v211 = vadd.f32 %v45, %v210
    %v212 = vpop.f32.mrf.mxu0
    %213 = vdwg.mxu0
    %v214 = vsel %vm194, %v211, -inf
    %215 = vmax.xlane.f32.xlu0 %v214
    %v216 = vpop.xlane.xlu0 %215
    %v217 = vsub.f32 %v211, %v216
    %v218 = vmul.f32 %v217, 1.442695
    %v219 = vpow.pop %v218
    %v220 = vsel %vm194, %v219, 0.0
    %221 = vadd.xlane.f32.xlu0 %v220
    %v222 = vpop.xlane.xlu0 %221
    %v223 = vrcp.pop %v222
    %v224 = vmul.f32 %v219, %v223
    %v225 = vpack.c.bf16 %v224, %v224
    %v226 = vpack.c.bf16 %v178, %v178
    %v228 = vsel %vm194, %v225, 0
    %vm230 = vcmask 1043456
    %v232 = vsel %vm230, %v226, 0
    %234 = vmatpush.bf16.msra.mxu0 0
    %235 = vmatpush.bf16.msra.mxu0 0
    %236 = vmatpush.bf16.msra.mxu0 0
    %237 = vmatpush.bf16.msra.mxu0 0
    %238 = vmatpush.bf16.msra.mxu0 0
    %239 = vmatpush.bf16.msra.mxu0 0
    %240 = vmatpush.bf16.msra.mxu0 0
    %241 = vmatpush.bf16.msra.mxu0 %v232
    %242 = vmatmul.bf16.gmra.mxu0 %v228
    %v243 = vpop.f32.mrf.mxu0
    %v244 = vadd.f32 0.0, %v243
    %v245 = vpop.f32.mrf.mxu0
    %246 = vdwg.mxu0
    %v247 = vpack.c.bf16 %v244, %v244
    %248 = vrot.lane.b32.xlu0 %v190, 120
    %v249 = vpop.permute.xlu0 %248
    %250 = vrot.lane.b32.xlu0 %v190, 88
    %v251 = vpop.permute.xlu0 %250
    %v253 = vsel %vm194, %v249, 0
    %v256 = vsel %vm194, %v251, 0
    %258 = vmatpush.bf16.xpose.msra.mxu0 0
    %259 = vmatpush.bf16.xpose.msra.mxu0 0
    %260 = vmatpush.bf16.xpose.msra.mxu0 0
    %261 = vmatpush.bf16.xpose.msra.mxu0 0
    %262 = vmatpush.bf16.xpose.msra.mxu0 0
    %263 = vmatpush.bf16.xpose.msra.mxu0 0
    %264 = vmatpush.bf16.xpose.msra.mxu0 0
    %265 = vmatpush.bf16.xpose.msra.mxu0 %v256
    %266 = vmatmul.bf16.gmra.mxu0 %v253
    %v267 = vpop.f32.mrf.mxu0
    %v268 = vadd.f32 %v45, %v267
    %v269 = vpop.f32.mrf.mxu0
    %270 = vdwg.mxu0
    %v271 = vsel %vm194, %v268, -inf
    %272 = vmax.xlane.f32.xlu0 %v271
    %v273 = vpop.xlane.xlu0 %272
    %v274 = vsub.f32 %v268, %v273
    %v275 = vmul.f32 %v274, 1.442695
    %v276 = vpow.pop %v275
    %v277 = vsel %vm194, %v276, 0.0
    %278 = vadd.xlane.f32.xlu0 %v277
    %v279 = vpop.xlane.xlu0 %278
    %v280 = vrcp.pop %v279
    %v281 = vmul.f32 %v276, %v280
    %v282 = vpack.c.bf16 %v281, %v281
    %284 = vrot.lane.b32.xlu0 %v226, 120
    %v285 = vpop.permute.xlu0 %284
    %v287 = vsel %vm194, %v282, 0
    %v290 = vsel %vm230, %v285, 0
    %292 = vmatpush.bf16.msra.mxu0 0
    %293 = vmatpush.bf16.msra.mxu0 0
    %294 = vmatpush.bf16.msra.mxu0 0
    %295 = vmatpush.bf16.msra.mxu0 0
    %296 = vmatpush.bf16.msra.mxu0 0
    %297 = vmatpush.bf16.msra.mxu0 0
    %298 = vmatpush.bf16.msra.mxu0 0
    %299 = vmatpush.bf16.msra.mxu0 %v290
    %300 = vmatmul.bf16.gmra.mxu0 %v287
    %v301 = vpop.f32.mrf.mxu0
    %v302 = vadd.f32 0.0, %v301
    %v303 = vpop.f32.mrf.mxu0
    %304 = vdwg.mxu0
    %v305 = vpack.c.bf16 %v302, %v302
    %v307 = vsel %vm194, %v305, 0
    %v310 = vsel %vm230, %v187, 0
    %312 = vmatpush.bf16.msra.mxu0 0
    %313 = vmatpush.bf16.msra.mxu0 0
    %314 = vmatpush.bf16.msra.mxu0 0
    %315 = vmatpush.bf16.msra.mxu0 0
    %316 = vmatpush.bf16.msra.mxu0 0
    %317 = vmatpush.bf16.msra.mxu0 0
    %318 = vmatpush.bf16.msra.mxu0 0
    %319 = vmatpush.bf16.msra.mxu0 %v310
    %320 = vmatmul.bf16.gmra.mxu0 %v307
    %v321 = vpop.f32.mrf.mxu0
    %v322 = vadd.f32 0.0, %v321
    %v323 = vpop.f32.mrf.mxu0
    %324 = vdwg.mxu0
    %v326 = vsel %vm194, %v247, 0
    %v329 = vsel %vm230, %v186, 0
    %331 = vmatpush.bf16.msra.mxu0 0
    %332 = vmatpush.bf16.msra.mxu0 0
    %333 = vmatpush.bf16.msra.mxu0 0
    %334 = vmatpush.bf16.msra.mxu0 0
    %335 = vmatpush.bf16.msra.mxu0 0
    %336 = vmatpush.bf16.msra.mxu0 0
    %337 = vmatpush.bf16.msra.mxu0 0
    %338 = vmatpush.bf16.msra.mxu0 %v329
    %339 = vmatmul.bf16.gmra.mxu0 %v326
    %v340 = vpop.f32.mrf.mxu0
    %v341 = vadd.f32 %v322, %v340
    %v342 = vpop.f32.mrf.mxu0
    %343 = vdwg.mxu0
    %344 = vrot.lane.b32.xlu0 %v190, 112
    %v345 = vpop.permute.xlu0 %344
    %346 = vrot.lane.b32.xlu0 %v190, 80
    %v347 = vpop.permute.xlu0 %346
    %v349 = vsel %vm194, %v345, 0
    %v352 = vsel %vm194, %v347, 0
    %354 = vmatpush.bf16.xpose.msra.mxu0 0
    %355 = vmatpush.bf16.xpose.msra.mxu0 0
    %356 = vmatpush.bf16.xpose.msra.mxu0 0
    %357 = vmatpush.bf16.xpose.msra.mxu0 0
    %358 = vmatpush.bf16.xpose.msra.mxu0 0
    %359 = vmatpush.bf16.xpose.msra.mxu0 0
    %360 = vmatpush.bf16.xpose.msra.mxu0 0
    %361 = vmatpush.bf16.xpose.msra.mxu0 %v352
    %362 = vmatmul.bf16.gmra.mxu0 %v349
    %v363 = vpop.f32.mrf.mxu0
    %v364 = vadd.f32 %v45, %v363
    %v365 = vpop.f32.mrf.mxu0
    %366 = vdwg.mxu0
    %v367 = vsel %vm194, %v364, -inf
    %368 = vmax.xlane.f32.xlu0 %v367
    %v369 = vpop.xlane.xlu0 %368
    %v370 = vsub.f32 %v364, %v369
    %v371 = vmul.f32 %v370, 1.442695
    %v372 = vpow.pop %v371
    %v373 = vsel %vm194, %v372, 0.0
    %374 = vadd.xlane.f32.xlu0 %v373
    %v375 = vpop.xlane.xlu0 %374
    %v376 = vrcp.pop %v375
    %v377 = vmul.f32 %v372, %v376
    %v378 = vpack.c.bf16 %v377, %v377
    %379 = vrot.lane.b32.xlu0 %v226, 112
    %v380 = vpop.permute.xlu0 %379
    %v382 = vsel %vm194, %v378, 0
    %v385 = vsel %vm230, %v380, 0
    %387 = vmatpush.bf16.msra.mxu0 0
    %388 = vmatpush.bf16.msra.mxu0 0
    %389 = vmatpush.bf16.msra.mxu0 0
    %390 = vmatpush.bf16.msra.mxu0 0
    %391 = vmatpush.bf16.msra.mxu0 0
    %392 = vmatpush.bf16.msra.mxu0 0
    %393 = vmatpush.bf16.msra.mxu0 0
    %394 = vmatpush.bf16.msra.mxu0 %v385
    %395 = vmatmul.bf16.gmra.mxu0 %v382
    %v396 = vpop.f32.mrf.mxu0
    %v397 = vadd.f32 0.0, %v396
    %v398 = vpop.f32.mrf.mxu0
    %399 = vdwg.mxu0
    %v400 = vpack.c.bf16 %v397, %v397
    %v402 = vsel %vm194, %v400, 0
    %v405 = vsel %vm230, %v188, 0
    %407 = vmatpush.bf16.msra.mxu0 0
    %408 = vmatpush.bf16.msra.mxu0 0
    %409 = vmatpush.bf16.msra.mxu0 0
    %410 = vmatpush.bf16.msra.mxu0 0
    %411 = vmatpush.bf16.msra.mxu0 0
    %412 = vmatpush.bf16.msra.mxu0 0
    %413 = vmatpush.bf16.msra.mxu0 0
    %414 = vmatpush.bf16.msra.mxu0 %v405
    %415 = vmatmul.bf16.gmra.mxu0 %v402
    %v416 = vpop.f32.mrf.mxu0
    %v417 = vadd.f32 0.0, %v416
    %v418 = vpop.f32.mrf.mxu0
    %419 = vdwg.mxu0
    %v420 = vadd.f32 %v341, %v417
    %421 = vrot.lane.b32.xlu0 %v190, 104
    %v422 = vpop.permute.xlu0 %421
    %423 = vrot.lane.b32.xlu0 %v190, 72
    %v424 = vpop.permute.xlu0 %423
    %v426 = vsel %vm194, %v422, 0
    %v429 = vsel %vm194, %v424, 0
    %431 = vmatpush.bf16.xpose.msra.mxu0 0
    %432 = vmatpush.bf16.xpose.msra.mxu0 0
    %433 = vmatpush.bf16.xpose.msra.mxu0 0
    %434 = vmatpush.bf16.xpose.msra.mxu0 0
    %435 = vmatpush.bf16.xpose.msra.mxu0 0
    %436 = vmatpush.bf16.xpose.msra.mxu0 0
    %437 = vmatpush.bf16.xpose.msra.mxu0 0
    %438 = vmatpush.bf16.xpose.msra.mxu0 %v429
    %439 = vmatmul.bf16.gmra.mxu0 %v426
    %v440 = vpop.f32.mrf.mxu0
    %v441 = vadd.f32 %v45, %v440
    %v442 = vpop.f32.mrf.mxu0
    %443 = vdwg.mxu0
    %v444 = vsel %vm194, %v441, -inf
    %445 = vmax.xlane.f32.xlu0 %v444
    %v446 = vpop.xlane.xlu0 %445
    %v447 = vsub.f32 %v441, %v446
    %v448 = vmul.f32 %v447, 1.442695
    %v449 = vpow.pop %v448
    %v450 = vsel %vm194, %v449, 0.0
    %451 = vadd.xlane.f32.xlu0 %v450
    %v452 = vpop.xlane.xlu0 %451
    %v453 = vrcp.pop %v452
    %v454 = vmul.f32 %v449, %v453
    %v455 = vpack.c.bf16 %v454, %v454
    %456 = vrot.lane.b32.xlu0 %v226, 104
    %v457 = vpop.permute.xlu0 %456
    %v459 = vsel %vm194, %v455, 0
    %v462 = vsel %vm230, %v457, 0
    %464 = vmatpush.bf16.msra.mxu0 0
    %465 = vmatpush.bf16.msra.mxu0 0
    %466 = vmatpush.bf16.msra.mxu0 0
    %467 = vmatpush.bf16.msra.mxu0 0
    %468 = vmatpush.bf16.msra.mxu0 0
    %469 = vmatpush.bf16.msra.mxu0 0
    %470 = vmatpush.bf16.msra.mxu0 0
    %471 = vmatpush.bf16.msra.mxu0 %v462
    %472 = vmatmul.bf16.gmra.mxu0 %v459
    %v473 = vpop.f32.mrf.mxu0
    %v474 = vadd.f32 0.0, %v473
    %v475 = vpop.f32.mrf.mxu0
    %476 = vdwg.mxu0
    %v477 = vpack.c.bf16 %v474, %v474
    %v479 = vsel %vm194, %v477, 0
    %v482 = vsel %vm230, %v189, 0
    %484 = vmatpush.bf16.msra.mxu0 0
    %485 = vmatpush.bf16.msra.mxu0 0
    %486 = vmatpush.bf16.msra.mxu0 0
    %487 = vmatpush.bf16.msra.mxu0 0
    %488 = vmatpush.bf16.msra.mxu0 0
    %489 = vmatpush.bf16.msra.mxu0 0
    %490 = vmatpush.bf16.msra.mxu0 0
    %491 = vmatpush.bf16.msra.mxu0 %v482
    %492 = vmatmul.bf16.gmra.mxu0 %v479
    %v493 = vpop.f32.mrf.mxu0
    %v494 = vadd.f32 0.0, %v493
    %v495 = vpop.f32.mrf.mxu0
    %496 = vdwg.mxu0
    %v497 = vadd.f32 %v420, %v494
    %v498 = vmul.f32 %v152, 0.5
    %v499 = vmul.f32 %v152, 0.044715
    %v500 = vmul.f32 %v499, %v152
    %v501 = vmul.f32 %v500, %v152
    %v502 = vadd.f32 %v152, %v501
    %v503 = vmul.f32 %v502, 0.7978846
    %v504 = vtanh.pop %v503
    %v505 = vadd.f32 %v504, 1.0
    %v506 = vmul.f32 %v498, %v505
    %v507 = vpack.c.bf16 %v506, %v506
    %v508 = vld [vmem:[%s5] sm:$0xf]
    %v509 = vld [vmem:[%s5 + $0x4] sm:$0xf]
    %v510 = vld [vmem:[%s5 + $0x8] sm:$0xf]
    %v511 = vld [vmem:[%s5 + $0xc] sm:$0xf]
    %v512 = vld [vmem:[%s5 + $0x10] sm:$0xf]
    %v513 = vld [vmem:[%s5 + $0x14] sm:$0xf]
    %v514 = vld [vmem:[%s5 + $0x18] sm:$0xf]
    %v515 = vld [vmem:[%s5 + $0x1c] sm:$0xf]
    %v516 = vld [vmem:[%s5 + $0x20] sm:$0xf]
    %v517 = vld [vmem:[%s5 + $0x24] sm:$0xf]
    %v518 = vld [vmem:[%s5 + $0x28] sm:$0xf]
    %v519 = vld [vmem:[%s5 + $0x2c] sm:$0xf]
    %v520 = vld [vmem:[%s5 + $0x30] sm:$0xf]
    %v521 = vld [vmem:[%s5 + $0x34] sm:$0xf]
    %v522 = vld [vmem:[%s5 + $0x38] sm:$0xf]
    %v523 = vld [vmem:[%s5 + $0x3c] sm:$0xf]
    %v540 = vunpack.c.l.b16 %v508
    %v541 = vunpack.c.l.b16 %v509
    %v542 = vunpack.c.l.b16 %v510
    %v543 = vunpack.c.l.b16 %v511
    %v544 = vunpack.c.l.b16 %v512
    %v545 = vunpack.c.l.b16 %v513
    %v546 = vunpack.c.l.b16 %v514
    %v547 = vunpack.c.l.b16 %v515
    %v548 = vunpack.c.l.b16 %v516
    %v549 = vunpack.c.l.b16 %v517
    %v550 = vunpack.c.l.b16 %v518
    %v551 = vunpack.c.l.b16 %v519
    %v552 = vunpack.c.l.b16 %v520
    %v553 = vunpack.c.l.b16 %v521
    %v554 = vunpack.c.l.b16 %v522
    %v555 = vunpack.c.l.b16 %v523
    %v556 = vpack.c.b16 %v541, %v540
    %v557 = vpack.c.b16 %v543, %v542
    %v558 = vpack.c.b16 %v545, %v544
    %v559 = vpack.c.b16 %v547, %v546
    %v560 = vpack.c.b16 %v549, %v548
    %v561 = vpack.c.b16 %v551, %v550
    %v562 = vpack.c.b16 %v553, %v552
    %v563 = vpack.c.b16 %v555, %v554
    %572 = vmatpush.bf16.msra.mxu0 %v563
    %573 = vmatpush.bf16.msra.mxu0 %v562
    %574 = vmatpush.bf16.msra.mxu0 %v561
    %575 = vmatpush.bf16.msra.mxu0 %v560
    %576 = vmatpush.bf16.msra.mxu0 %v559
    %577 = vmatpush.bf16.msra.mxu0 %v558
    %578 = vmatpush.bf16.msra.mxu0 %v557
    %579 = vmatpush.bf16.msra.mxu0 %v556
    %580 = vmatmul.bf16.gmra.mxu0 %v507
    %v581 = vpop.f32.mrf.mxu0
    %v582 = vadd.f32 0.0, %v581
    %v583 = vpop.f32.mrf.mxu0
    %584 = vdwg.mxu0
    %v585 = vadd.f32 %v497, %v582
    %v586 = vld [vmem:[%s7] sm:$0x1]
    %v588 = vperm.slane %v586, 0
    %v590 = vadd.f32 %v585, %v588
    %v591 = vadd.f32 %v590, %v49
    %s592 = scalar_lea.vmem %s1, 1
    %v593 = vld [vmem:[%s592] sm:$0x1]
    %s594 = scalar_lea.vmem %s2, 1
    %v595 = vld [vmem:[%s594] sm:$0x1]
    %v596 = vsel %vm52, %v591, 0.0
    %597 = vadd.xlane.f32.xlu0 %v596
    %v598 = vpop.xlane.xlu0 %597
    %v599 = vmul.f32 %v598, %v62
    %v600 = vsub.f32 %v591, %v599
    %v601 = vmul.f32 %v600, %v600
    %v602 = vsel %vm52, %v601, 0.0
    %603 = vadd.xlane.f32.xlu0 %v602
    %v604 = vpop.xlane.xlu0 %603
    %v605 = vmul.f32 %v604, %v62
    %v606 = vadd.f32 %v605, 1e-05
    %v607 = vrsqrt.pop %v606
    %v608 = vmul.f32 %v607, %v606
    %v609 = vmul.f32 %v608, %v607
    %v610 = vmul.f32 0.5, %v609
    %v611 = vsub.f32 1.5, %v610
    %v612 = vmul.f32 %v607, %v611
    %vm613 = vweird.f32 %v606
    %vm614 = vweird.f32 %v607
    %vm615 = vmor %vm613, %vm614
    %v616 = vsel %vm615, %v607, %v612
    %v617 = vmul.f32 %v600, %v616
    %v619 = vperm.slane %v593, 0
    %v621 = vmul.f32 %v617, %v619
    %v623 = vperm.slane %v595, 0
    %v625 = vadd.f32 %v621, %v623
    %v626 = vpack.c.bf16 %v625, %v625
    %s627 = scalar_lea.vmem %s3, 48
    %v628 = vld [vmem:[%s627] sm:$0xff]
    %v629 = vld [vmem:[%s627 + $0x8] sm:$0xf]
    %v630 = vld [vmem:[%s627 + $0xc] sm:$0xff]
    %v631 = vld [vmem:[%s627 + $0x14] sm:$0xf]
    %v632 = vld [vmem:[%s627 + $0x18] sm:$0xff]
    %v633 = vld [vmem:[%s627 + $0x20] sm:$0xf]
    %v634 = vld [vmem:[%s627 + $0x24] sm:$0xff]
    %v635 = vld [vmem:[%s627 + $0x2c] sm:$0xf]
    %s636 = scalar_lea.vmem %s4, 3
    %v637 = vld [vmem:[%s636] sm:$0x7]
    %v639 = vperm.slane %v637, 0
    %v640 = vperm.slane %v637, 1
    %v641 = vperm.slane %v637, 2
    %v653 = vunpack.c.l.b16 %v628
    %v654 = vunpack.c.h.b16 %v628
    %v655 = vunpack.c.l.b16 %v629
    %v656 = vunpack.c.l.b16 %v630
    %v657 = vunpack.c.h.b16 %v630
    %v658 = vunpack.c.l.b16 %v631
    %v659 = vunpack.c.l.b16 %v632
    %v660 = vunpack.c.h.b16 %v632
    %v661 = vunpack.c.l.b16 %v633
    %v662 = vunpack.c.l.b16 %v634
    %v663 = vunpack.c.h.b16 %v634
    %v664 = vunpack.c.l.b16 %v635
    %v665 = vpack.c.b16 %v656, %v653
    %v666 = vpack.c.b16 %v657, %v654
    %v667 = vpack.c.b16 %v658, %v655
    %v668 = vpack.c.b16 %v662, %v659
    %v669 = vpack.c.b16 %v663, %v660
    %v670 = vpack.c.b16 %v664, %v661
    %v678 = vsel %vm52, %v626, 0
    %680 = vmatpush.bf16.msra.mxu0 0
    %681 = vmatpush.bf16.msra.mxu0 0
    %682 = vmatpush.bf16.msra.mxu0 0
    %683 = vmatpush.bf16.msra.mxu0 0
    %684 = vmatpush.bf16.msra.mxu0 0
    %685 = vmatpush.bf16.msra.mxu0 0
    %686 = vmatpush.bf16.msra.mxu0 %v668
    %687 = vmatpush.bf16.msra.mxu0 %v665
    %688 = vmatmul.bf16.gmra.mxu0 %v678
    %v689 = vpop.f32.mrf.mxu0
    %v690 = vadd.f32 %v639, %v689
    %v691 = vpop.f32.mrf.mxu0
    %692 = vdwg.mxu0
    %693 = vmatpush.bf16.msra.mxu0 0
    %694 = vmatpush.bf16.msra.mxu0 0
    %695 = vmatpush.bf16.msra.mxu0 0
    %696 = vmatpush.bf16.msra.mxu0 0
    %697 = vmatpush.bf16.msra.mxu0 0
    %698 = vmatpush.bf16.msra.mxu0 0
    %699 = vmatpush.bf16.msra.mxu0 %v669
    %700 = vmatpush.bf16.msra.mxu0 %v666
    %701 = vmatmul.bf16.gmra.mxu0 %v678
    %v702 = vpop.f32.mrf.mxu0
    %v703 = vadd.f32 %v640, %v702
    %v704 = vpop.f32.mrf.mxu0
    %705 = vdwg.mxu0
    %706 = vmatpush.bf16.msra.mxu0 0
    %707 = vmatpush.bf16.msra.mxu0 0
    %708 = vmatpush.bf16.msra.mxu0 0
    %709 = vmatpush.bf16.msra.mxu0 0
    %710 = vmatpush.bf16.msra.mxu0 0
    %711 = vmatpush.bf16.msra.mxu0 0
    %712 = vmatpush.bf16.msra.mxu0 %v670
    %713 = vmatpush.bf16.msra.mxu0 %v667
    %714 = vmatmul.bf16.gmra.mxu0 %v678
    %v715 = vpop.f32.mrf.mxu0
    %v716 = vadd.f32 %v641, %v715
    %v717 = vpop.f32.mrf.mxu0
    %718 = vdwg.mxu0
    %719 = vrot.lane.b32.xlu0 %v703, 64
    %v720 = vpop.permute.xlu0 %719
    %v721 = vmul.f32 %v703, %v46
    %v722 = vmul.f32 %v720, %v48
    %v723 = vadd.f32 %v721, %v722
    %s724 = scalar_lea.vmem %s6, 16
    %v725 = vld [vmem:[%s724] sm:$0xf]
    %v726 = vld [vmem:[%s724 + $0x4] sm:$0xf]
    %v727 = vld [vmem:[%s724 + $0x8] sm:$0xf]
    %v728 = vld [vmem:[%s724 + $0xc] sm:$0xf]
    %v729 = vpack.c.bf16 %v723, %v723
    %731 = vrot.lane.b32.xlu0 %v729, 96
    %v732 = vpop.permute.xlu0 %731
    %v734 = vsel %vm194, %v729, 0
    %v737 = vsel %vm194, %v732, 0
    %739 = vmatpush.bf16.xpose.msra.mxu0 0
    %740 = vmatpush.bf16.xpose.msra.mxu0 0
    %741 = vmatpush.bf16.xpose.msra.mxu0 0
    %742 = vmatpush.bf16.xpose.msra.mxu0 0
    %743 = vmatpush.bf16.xpose.msra.mxu0 0
    %744 = vmatpush.bf16.xpose.msra.mxu0 0
    %745 = vmatpush.bf16.xpose.msra.mxu0 0
    %746 = vmatpush.bf16.xpose.msra.mxu0 %v737
    %747 = vmatmul.bf16.gmra.mxu0 %v734
    %v748 = vpop.f32.mrf.mxu0
    %v749 = vadd.f32 %v45, %v748
    %v750 = vpop.f32.mrf.mxu0
    %751 = vdwg.mxu0
    %v752 = vsel %vm194, %v749, -inf
    %753 = vmax.xlane.f32.xlu0 %v752
    %v754 = vpop.xlane.xlu0 %753
    %v755 = vsub.f32 %v749, %v754
    %v756 = vmul.f32 %v755, 1.442695
    %v757 = vpow.pop %v756
    %v758 = vsel %vm194, %v757, 0.0
    %759 = vadd.xlane.f32.xlu0 %v758
    %v760 = vpop.xlane.xlu0 %759
    %v761 = vrcp.pop %v760
    %v762 = vmul.f32 %v757, %v761
    %v763 = vpack.c.bf16 %v762, %v762
    %v764 = vpack.c.bf16 %v716, %v716
    %v766 = vsel %vm194, %v763, 0
    %v769 = vsel %vm230, %v764, 0
    %771 = vmatpush.bf16.msra.mxu0 0
    %772 = vmatpush.bf16.msra.mxu0 0
    %773 = vmatpush.bf16.msra.mxu0 0
    %774 = vmatpush.bf16.msra.mxu0 0
    %775 = vmatpush.bf16.msra.mxu0 0
    %776 = vmatpush.bf16.msra.mxu0 0
    %777 = vmatpush.bf16.msra.mxu0 0
    %778 = vmatpush.bf16.msra.mxu0 %v769
    %779 = vmatmul.bf16.gmra.mxu0 %v766
    %v780 = vpop.f32.mrf.mxu0
    %v781 = vadd.f32 0.0, %v780
    %v782 = vpop.f32.mrf.mxu0
    %783 = vdwg.mxu0
    %v784 = vpack.c.bf16 %v781, %v781
    %785 = vrot.lane.b32.xlu0 %v729, 120
    %v786 = vpop.permute.xlu0 %785
    %787 = vrot.lane.b32.xlu0 %v729, 88
    %v788 = vpop.permute.xlu0 %787
    %v790 = vsel %vm194, %v786, 0
    %v793 = vsel %vm194, %v788, 0
    %795 = vmatpush.bf16.xpose.msra.mxu0 0
    %796 = vmatpush.bf16.xpose.msra.mxu0 0
    %797 = vmatpush.bf16.xpose.msra.mxu0 0
    %798 = vmatpush.bf16.xpose.msra.mxu0 0
    %799 = vmatpush.bf16.xpose.msra.mxu0 0
    %800 = vmatpush.bf16.xpose.msra.mxu0 0
    %801 = vmatpush.bf16.xpose.msra.mxu0 0
    %802 = vmatpush.bf16.xpose.msra.mxu0 %v793
    %803 = vmatmul.bf16.gmra.mxu0 %v790
    %v804 = vpop.f32.mrf.mxu0
    %v805 = vadd.f32 %v45, %v804
    %v806 = vpop.f32.mrf.mxu0
    %807 = vdwg.mxu0
    %v808 = vsel %vm194, %v805, -inf
    %809 = vmax.xlane.f32.xlu0 %v808
    %v810 = vpop.xlane.xlu0 %809
    %v811 = vsub.f32 %v805, %v810
    %v812 = vmul.f32 %v811, 1.442695
    %v813 = vpow.pop %v812
    %v814 = vsel %vm194, %v813, 0.0
    %815 = vadd.xlane.f32.xlu0 %v814
    %v816 = vpop.xlane.xlu0 %815
    %v817 = vrcp.pop %v816
    %v818 = vmul.f32 %v813, %v817
    %v819 = vpack.c.bf16 %v818, %v818
    %821 = vrot.lane.b32.xlu0 %v764, 120
    %v822 = vpop.permute.xlu0 %821
    %v824 = vsel %vm194, %v819, 0
    %v827 = vsel %vm230, %v822, 0
    %829 = vmatpush.bf16.msra.mxu0 0
    %830 = vmatpush.bf16.msra.mxu0 0
    %831 = vmatpush.bf16.msra.mxu0 0
    %832 = vmatpush.bf16.msra.mxu0 0
    %833 = vmatpush.bf16.msra.mxu0 0
    %834 = vmatpush.bf16.msra.mxu0 0
    %835 = vmatpush.bf16.msra.mxu0 0
    %836 = vmatpush.bf16.msra.mxu0 %v827
    %837 = vmatmul.bf16.gmra.mxu0 %v824
    %v838 = vpop.f32.mrf.mxu0
    %v839 = vadd.f32 0.0, %v838
    %v840 = vpop.f32.mrf.mxu0
    %841 = vdwg.mxu0
    %v842 = vpack.c.bf16 %v839, %v839
    %v844 = vsel %vm194, %v842, 0
    %v847 = vsel %vm230, %v726, 0
    %849 = vmatpush.bf16.msra.mxu0 0
    %850 = vmatpush.bf16.msra.mxu0 0
    %851 = vmatpush.bf16.msra.mxu0 0
    %852 = vmatpush.bf16.msra.mxu0 0
    %853 = vmatpush.bf16.msra.mxu0 0
    %854 = vmatpush.bf16.msra.mxu0 0
    %855 = vmatpush.bf16.msra.mxu0 0
    %856 = vmatpush.bf16.msra.mxu0 %v847
    %857 = vmatmul.bf16.gmra.mxu0 %v844
    %v858 = vpop.f32.mrf.mxu0
    %v859 = vadd.f32 0.0, %v858
    %v860 = vpop.f32.mrf.mxu0
    %861 = vdwg.mxu0
    %v863 = vsel %vm194, %v784, 0
    %v866 = vsel %vm230, %v725, 0
    %868 = vmatpush.bf16.msra.mxu0 0
    %869 = vmatpush.bf16.msra.mxu0 0
    %870 = vmatpush.bf16.msra.mxu0 0
    %871 = vmatpush.bf16.msra.mxu0 0
    %872 = vmatpush.bf16.msra.mxu0 0
    %873 = vmatpush.bf16.msra.mxu0 0
    %874 = vmatpush.bf16.msra.mxu0 0
    %875 = vmatpush.bf16.msra.mxu0 %v866
    %876 = vmatmul.bf16.gmra.mxu0 %v863
    %v877 = vpop.f32.mrf.mxu0
    %v878 = vadd.f32 %v859, %v877
    %v879 = vpop.f32.mrf.mxu0
    %880 = vdwg.mxu0
    %881 = vrot.lane.b32.xlu0 %v729, 112
    %v882 = vpop.permute.xlu0 %881
    %883 = vrot.lane.b32.xlu0 %v729, 80
    %v884 = vpop.permute.xlu0 %883
    %v886 = vsel %vm194, %v882, 0
    %v889 = vsel %vm194, %v884, 0
    %891 = vmatpush.bf16.xpose.msra.mxu0 0
    %892 = vmatpush.bf16.xpose.msra.mxu0 0
    %893 = vmatpush.bf16.xpose.msra.mxu0 0
    %894 = vmatpush.bf16.xpose.msra.mxu0 0
    %895 = vmatpush.bf16.xpose.msra.mxu0 0
    %896 = vmatpush.bf16.xpose.msra.mxu0 0
    %897 = vmatpush.bf16.xpose.msra.mxu0 0
    %898 = vmatpush.bf16.xpose.msra.mxu0 %v889
    %899 = vmatmul.bf16.gmra.mxu0 %v886
    %v900 = vpop.f32.mrf.mxu0
    %v901 = vadd.f32 %v45, %v900
    %v902 = vpop.f32.mrf.mxu0
    %903 = vdwg.mxu0
    %v904 = vsel %vm194, %v901, -inf
    %905 = vmax.xlane.f32.xlu0 %v904
    %v906 = vpop.xlane.xlu0 %905
    %v907 = vsub.f32 %v901, %v906
    %v908 = vmul.f32 %v907, 1.442695
    %v909 = vpow.pop %v908
    %v910 = vsel %vm194, %v909, 0.0
    %911 = vadd.xlane.f32.xlu0 %v910
    %v912 = vpop.xlane.xlu0 %911
    %v913 = vrcp.pop %v912
    %v914 = vmul.f32 %v909, %v913
    %v915 = vpack.c.bf16 %v914, %v914
    %916 = vrot.lane.b32.xlu0 %v764, 112
    %v917 = vpop.permute.xlu0 %916
    %v919 = vsel %vm194, %v915, 0
    %v922 = vsel %vm230, %v917, 0
    %924 = vmatpush.bf16.msra.mxu0 0
    %925 = vmatpush.bf16.msra.mxu0 0
    %926 = vmatpush.bf16.msra.mxu0 0
    %927 = vmatpush.bf16.msra.mxu0 0
    %928 = vmatpush.bf16.msra.mxu0 0
    %929 = vmatpush.bf16.msra.mxu0 0
    %930 = vmatpush.bf16.msra.mxu0 0
    %931 = vmatpush.bf16.msra.mxu0 %v922
    %932 = vmatmul.bf16.gmra.mxu0 %v919
    %v933 = vpop.f32.mrf.mxu0
    %v934 = vadd.f32 0.0, %v933
    %v935 = vpop.f32.mrf.mxu0
    %936 = vdwg.mxu0
    %v937 = vpack.c.bf16 %v934, %v934
    %v939 = vsel %vm194, %v937, 0
    %v942 = vsel %vm230, %v727, 0
    %944 = vmatpush.bf16.msra.mxu0 0
    %945 = vmatpush.bf16.msra.mxu0 0
    %946 = vmatpush.bf16.msra.mxu0 0
    %947 = vmatpush.bf16.msra.mxu0 0
    %948 = vmatpush.bf16.msra.mxu0 0
    %949 = vmatpush.bf16.msra.mxu0 0
    %950 = vmatpush.bf16.msra.mxu0 0
    %951 = vmatpush.bf16.msra.mxu0 %v942
    %952 = vmatmul.bf16.gmra.mxu0 %v939
    %v953 = vpop.f32.mrf.mxu0
    %v954 = vadd.f32 0.0, %v953
    %v955 = vpop.f32.mrf.mxu0
    %956 = vdwg.mxu0
    %v957 = vadd.f32 %v878, %v954
    %958 = vrot.lane.b32.xlu0 %v729, 104
    %v959 = vpop.permute.xlu0 %958
    %960 = vrot.lane.b32.xlu0 %v729, 72
    %v961 = vpop.permute.xlu0 %960
    %v963 = vsel %vm194, %v959, 0
    %v966 = vsel %vm194, %v961, 0
    %968 = vmatpush.bf16.xpose.msra.mxu0 0
    %969 = vmatpush.bf16.xpose.msra.mxu0 0
    %970 = vmatpush.bf16.xpose.msra.mxu0 0
    %971 = vmatpush.bf16.xpose.msra.mxu0 0
    %972 = vmatpush.bf16.xpose.msra.mxu0 0
    %973 = vmatpush.bf16.xpose.msra.mxu0 0
    %974 = vmatpush.bf16.xpose.msra.mxu0 0
    %975 = vmatpush.bf16.xpose.msra.mxu0 %v966
    %976 = vmatmul.bf16.gmra.mxu0 %v963
    %v977 = vpop.f32.mrf.mxu0
    %v978 = vadd.f32 %v45, %v977
    %v979 = vpop.f32.mrf.mxu0
    %980 = vdwg.mxu0
    %v981 = vsel %vm194, %v978, -inf
    %982 = vmax.xlane.f32.xlu0 %v981
    %v983 = vpop.xlane.xlu0 %982
    %v984 = vsub.f32 %v978, %v983
    %v985 = vmul.f32 %v984, 1.442695
    %v986 = vpow.pop %v985
    %v987 = vsel %vm194, %v986, 0.0
    %988 = vadd.xlane.f32.xlu0 %v987
    %v989 = vpop.xlane.xlu0 %988
    %v990 = vrcp.pop %v989
    %v991 = vmul.f32 %v986, %v990
    %v992 = vpack.c.bf16 %v991, %v991
    %993 = vrot.lane.b32.xlu0 %v764, 104
    %v994 = vpop.permute.xlu0 %993
    %v996 = vsel %vm194, %v992, 0
    %v999 = vsel %vm230, %v994, 0
    %1001 = vmatpush.bf16.msra.mxu0 0
    %1002 = vmatpush.bf16.msra.mxu0 0
    %1003 = vmatpush.bf16.msra.mxu0 0
    %1004 = vmatpush.bf16.msra.mxu0 0
    %1005 = vmatpush.bf16.msra.mxu0 0
    %1006 = vmatpush.bf16.msra.mxu0 0
    %1007 = vmatpush.bf16.msra.mxu0 0
    %1008 = vmatpush.bf16.msra.mxu0 %v999
    %1009 = vmatmul.bf16.gmra.mxu0 %v996
    %v1010 = vpop.f32.mrf.mxu0
    %v1011 = vadd.f32 0.0, %v1010
    %v1012 = vpop.f32.mrf.mxu0
    %1013 = vdwg.mxu0
    %v1014 = vpack.c.bf16 %v1011, %v1011
    %v1016 = vsel %vm194, %v1014, 0
    %v1019 = vsel %vm230, %v728, 0
    %1021 = vmatpush.bf16.msra.mxu0 0
    %1022 = vmatpush.bf16.msra.mxu0 0
    %1023 = vmatpush.bf16.msra.mxu0 0
    %1024 = vmatpush.bf16.msra.mxu0 0
    %1025 = vmatpush.bf16.msra.mxu0 0
    %1026 = vmatpush.bf16.msra.mxu0 0
    %1027 = vmatpush.bf16.msra.mxu0 0
    %1028 = vmatpush.bf16.msra.mxu0 %v1019
    %1029 = vmatmul.bf16.gmra.mxu0 %v1016
    %v1030 = vpop.f32.mrf.mxu0
    %v1031 = vadd.f32 0.0, %v1030
    %v1032 = vpop.f32.mrf.mxu0
    %1033 = vdwg.mxu0
    %v1034 = vadd.f32 %v957, %v1031
    %v1035 = vmul.f32 %v690, 0.5
    %v1036 = vmul.f32 %v690, 0.044715
    %v1037 = vmul.f32 %v1036, %v690
    %v1038 = vmul.f32 %v1037, %v690
    %v1039 = vadd.f32 %v690, %v1038
    %v1040 = vmul.f32 %v1039, 0.7978846
    %v1041 = vtanh.pop %v1040
    %v1042 = vadd.f32 %v1041, 1.0
    %v1043 = vmul.f32 %v1035, %v1042
    %v1044 = vpack.c.bf16 %v1043, %v1043
    %s1045 = scalar_lea.vmem %s5, 64
    %v1046 = vld [vmem:[%s1045] sm:$0xf]
    %v1047 = vld [vmem:[%s1045 + $0x4] sm:$0xf]
    %v1048 = vld [vmem:[%s1045 + $0x8] sm:$0xf]
    %v1049 = vld [vmem:[%s1045 + $0xc] sm:$0xf]
    %v1050 = vld [vmem:[%s1045 + $0x10] sm:$0xf]
    %v1051 = vld [vmem:[%s1045 + $0x14] sm:$0xf]
    %v1052 = vld [vmem:[%s1045 + $0x18] sm:$0xf]
    %v1053 = vld [vmem:[%s1045 + $0x1c] sm:$0xf]
    %v1054 = vld [vmem:[%s1045 + $0x20] sm:$0xf]
    %v1055 = vld [vmem:[%s1045 + $0x24] sm:$0xf]
    %v1056 = vld [vmem:[%s1045 + $0x28] sm:$0xf]
    %v1057 = vld [vmem:[%s1045 + $0x2c] sm:$0xf]
    %v1058 = vld [vmem:[%s1045 + $0x30] sm:$0xf]
    %v1059 = vld [vmem:[%s1045 + $0x34] sm:$0xf]
    %v1060 = vld [vmem:[%s1045 + $0x38] sm:$0xf]
    %v1061 = vld [vmem:[%s1045 + $0x3c] sm:$0xf]
    %v1078 = vunpack.c.l.b16 %v1046
    %v1079 = vunpack.c.l.b16 %v1047
    %v1080 = vunpack.c.l.b16 %v1048
    %v1081 = vunpack.c.l.b16 %v1049
    %v1082 = vunpack.c.l.b16 %v1050
    %v1083 = vunpack.c.l.b16 %v1051
    %v1084 = vunpack.c.l.b16 %v1052
    %v1085 = vunpack.c.l.b16 %v1053
    %v1086 = vunpack.c.l.b16 %v1054
    %v1087 = vunpack.c.l.b16 %v1055
    %v1088 = vunpack.c.l.b16 %v1056
    %v1089 = vunpack.c.l.b16 %v1057
    %v1090 = vunpack.c.l.b16 %v1058
    %v1091 = vunpack.c.l.b16 %v1059
    %v1092 = vunpack.c.l.b16 %v1060
    %v1093 = vunpack.c.l.b16 %v1061
    %v1094 = vpack.c.b16 %v1079, %v1078
    %v1095 = vpack.c.b16 %v1081, %v1080
    %v1096 = vpack.c.b16 %v1083, %v1082
    %v1097 = vpack.c.b16 %v1085, %v1084
    %v1098 = vpack.c.b16 %v1087, %v1086
    %v1099 = vpack.c.b16 %v1089, %v1088
    %v1100 = vpack.c.b16 %v1091, %v1090
    %v1101 = vpack.c.b16 %v1093, %v1092
    %1110 = vmatpush.bf16.msra.mxu0 %v1101
    %1111 = vmatpush.bf16.msra.mxu0 %v1100
    %1112 = vmatpush.bf16.msra.mxu0 %v1099
    %1113 = vmatpush.bf16.msra.mxu0 %v1098
    %1114 = vmatpush.bf16.msra.mxu0 %v1097
    %1115 = vmatpush.bf16.msra.mxu0 %v1096
    %1116 = vmatpush.bf16.msra.mxu0 %v1095
    %1117 = vmatpush.bf16.msra.mxu0 %v1094
    %1118 = vmatmul.bf16.gmra.mxu0 %v1044
    %v1119 = vpop.f32.mrf.mxu0
    %v1120 = vadd.f32 0.0, %v1119
    %v1121 = vpop.f32.mrf.mxu0
    %1122 = vdwg.mxu0
    %v1123 = vadd.f32 %v1034, %v1120
    %s1124 = scalar_lea.vmem %s7, 1
    %v1125 = vld [vmem:[%s1124] sm:$0x1]
    %v1127 = vperm.slane %v1125, 0
    %v1129 = vadd.f32 %v1123, %v1127
    %v1130 = vadd.f32 %v1129, %v591
    %v1131 = vld [vmem:[%s9] sm:$0x1]
    %v1132 = vld [vmem:[%s10] sm:$0x1]
    %v1133 = vsel %vm52, %v1130, 0.0
    %1134 = vadd.xlane.f32.xlu0 %v1133
    %v1135 = vpop.xlane.xlu0 %1134
    %v1136 = vmul.f32 %v1135, %v62
    %v1137 = vsub.f32 %v1130, %v1136
    %v1138 = vmul.f32 %v1137, %v1137
    %v1139 = vsel %vm52, %v1138, 0.0
    %1140 = vadd.xlane.f32.xlu0 %v1139
    %v1141 = vpop.xlane.xlu0 %1140
    %v1142 = vmul.f32 %v1141, %v62
    %v1143 = vadd.f32 %v1142, 1e-05
    %v1144 = vrsqrt.pop %v1143
    %v1145 = vmul.f32 %v1144, %v1143
    %v1146 = vmul.f32 %v1145, %v1144
    %v1147 = vmul.f32 0.5, %v1146
    %v1148 = vsub.f32 1.5, %v1147
    %v1149 = vmul.f32 %v1144, %v1148
    %vm1150 = vweird.f32 %v1143
    %vm1151 = vweird.f32 %v1144
    %vm1152 = vmor %vm1150, %vm1151
    %v1153 = vsel %vm1152, %v1144, %v1149
    %v1154 = vmul.f32 %v1137, %v1153
    %v1156 = vperm.slane %v1131, 0
    %v1158 = vmul.f32 %v1154, %v1156
    %v1160 = vperm.slane %v1132, 0
    %v1162 = vadd.f32 %v1158, %v1160
    %1163 = vst.msk [vmem:[#allocation2] sm:$0xff] %vm52, %v1162
    // Predicated region
    $region46: #{phi_model_forward.1} parent=1 // pred_check
      _
    $region47: #{phi_model_forward.1} parent=1 // pred_check_branch
      %1165 = sbr.rel (0) target = $region49
    $region48: #{phi_model_forward.1} parent=1 // pred_region
      %1167 = vsyncadd [#allocation3], 0
      %s1169 = sshll.u32 [#allocation2], 4
      %s1170 = int_to_ptr.vmem [resolvable:$true] %s1169
      %s1171 = sshll.u32 %s11, 4
      %s1172 = int_to_ptr.hbm [resolvable:$true] %s1171
      %1174 = dma.vmem_to_hbm [thread:$0]  %s1170, 128, %s1172, [#allocation3]
    $region49: #{phi_model_forward.1} parent=1 // pred_fallthru
      _
    // Predicated region
    $region50: #{phi_model_forward.1} parent=1 // pred_check
      _
    $region51: #{phi_model_forward.1} parent=1 // pred_check_branch
      %1176 = sbr.rel (0) target = $region53
    $region52: #{phi_model_forward.1} parent=1 // pred_region
      %1178 = dma.done [#allocation3], 128
    $region53: #{phi_model_forward.1} parent=1 // pred_fallthru
      _
    %1179 = vsyncpa [#allocation3], 1

</llo_original>
